<compile_context>
chip_gen: v6e
topology: v6e:2x2x1
jax: 0.10.0
libtpu: 0.0.40
codegen_flags: <defaults>
</compile_context>

<pallas_src>
import functools

import jax
import jax.numpy as jnp
from jax.experimental import pallas as pl
from jax.experimental.pallas import tpu as pltpu

EPS = 1e-6
PADL = 128   # lane-aligned zero padding on each side of the flattened pixels


def localcnn_kernel(x_ref, wmask_ref, ln_w_ref, ln_b_ref, w1_ref, b1_ref,
                    wdw_ref, b2_ref, wsca_ref, bsca_ref, w3_ref, b3_ref,
                    beta_ref, o_ref, pad_ref, *, H, W):
    """One batch element per grid step; layout (C, H*W): channels on sublanes,
    pixels on lanes."""
    C = x_ref.shape[1]
    HW = H * W
    DW = 2 * C
    inv_c = 1.0 / C
    inv_hw = 1.0 / HW

    x = x_ref[0]                                            # (C, HW)

    # ---- LayerNorm2d: per-pixel normalization over channels (sublane reduce)
    mu = jnp.sum(x, axis=0, keepdims=True) * inv_c          # (1, HW)
    xc = x - mu
    var = jnp.sum(xc * xc, axis=0, keepdims=True) * inv_c   # (1, HW)
    inv_std = jax.lax.rsqrt(var + EPS)                      # EUP, not VALU div
    xn = xc * inv_std * ln_w_ref[...] + ln_b_ref[...]       # (C, HW)

    # ---- conv1: 1x1, C -> 2C, as VPU broadcast-MACs (K=C too small for MXU)
    w1 = w1_ref[...]                                        # (DW, C)
    y1 = w1[:, 0:1] * xn[0:1, :]
    for c in range(1, C):
        y1 = y1 + w1[:, c:c + 1] * xn[c:c + 1, :]
    y1 = y1 + b1_ref[...]                                   # (DW, HW)

    # ---- conv2: 3x3 depthwise, pad=1, via shifted lane windows of a padded
    #      VMEM scratch.  Row-boundary taps land in the zero pad; column-wrap
    #      taps are killed by the precomputed edge masks.
    zpad = jnp.zeros((DW, PADL), jnp.float32)
    pad_ref[:, 0:PADL] = zpad                               # aligned stores
    pad_ref[:, PADL + HW:PADL + HW + PADL] = zpad
    pad_ref[:, PADL:PADL + HW] = y1                         # aligned store

    wm = wmask_ref[...]                                     # (2, HW) float masks
    m_lo = wm[0:1, :]                                       # 1 where w >= 1
    m_hi = wm[1:2, :]                                       # 1 where w <= W-2
    wdw = wdw_ref[...]                                      # (DW, 9)

    acc = None
    for dh in (-1, 0, 1):
        for dw in (-1, 0, 1):
            k = (dh + 1) * 3 + (dw + 1)
            start = PADL + dh * W + dw                      # static offset
            tap = pad_ref[:, start:start + HW]              # (DW, HW)
            if dw == -1:
                tap = tap * m_lo
            elif dw == 1:
                tap = tap * m_hi
            contrib = tap * wdw[:, k:k + 1]
            acc = contrib if acc is None else acc + contrib
    y2 = acc + b2_ref[...]                                  # (DW, HW)

    # ---- SimpleGate: split channels in half, multiply ----
    g = y2[0:C, :] * y2[C:DW, :]                            # (C, HW)

    # ---- SCA: g * (W_sca @ mean_hw(g) + b_sca); mix-then-mean (same math,
    #      avoids transposes / scalar extraction).
    wsca = wsca_ref[...]                                    # (C, C)
    t = wsca[:, 0:1] * g[0:1, :]
    for c in range(1, C):
        t = t + wsca[:, c:c + 1] * g[c:c + 1, :]
    s = jnp.sum(t, axis=1, keepdims=True) * inv_hw + bsca_ref[...]   # (C, 1)
    gs = g * s

    # ---- conv3: 1x1, C -> C ----
    w3 = w3_ref[...]
    y3 = w3[:, 0:1] * gs[0:1, :]
    for c in range(1, C):
        y3 = y3 + w3[:, c:c + 1] * gs[c:c + 1, :]
    y3 = y3 + b3_ref[...]

    # ---- residual with learnable beta (dropout is Identity at rate 0) ----
    o_ref[0] = x + y3 * beta_ref[...]


def localcnn_block(x_nchw, params):
    """x_nchw: (N, C, H, W) float32. Returns (N, C, H, W)."""
    ln_w, ln_b, w1, b1, wdw, b2, wsca, bsca, w3, b3, beta = params
    N, C, H, W = x_nchw.shape
    HW = H * W
    DW = 2 * C

    # Free contiguous reshape; pixels land on the lane axis, channels on sublanes.
    x = x_nchw.reshape(N, C, HW)

    # Column-edge masks for the depthwise conv (1.0 = neighbour is valid).
    w_idx = jnp.arange(HW, dtype=jnp.int32) % W
    wmask = jnp.stack([(w_idx >= 1), (w_idx <= W - 2)]).astype(x.dtype)  # (2, HW)

    plist = (wmask, ln_w, ln_b, w1, b1, wdw, b2, wsca, bsca, w3, b3, beta)

    def full_spec(arr):
        shp = arr.shape
        return pl.BlockSpec(shp, lambda n, _s=shp: (0,) * len(_s))

    out = pl.pallas_call(
        functools.partial(localcnn_kernel, H=H, W=W),
        out_shape=jax.ShapeDtypeStruct((N, C, HW), x.dtype),
        grid=(N,),
        in_specs=[pl.BlockSpec((1, C, HW), lambda n: (n, 0, 0))]
                 + [full_spec(p) for p in plist],
        out_specs=pl.BlockSpec((1, C, HW), lambda n: (n, 0, 0)),
        scratch_shapes=[pltpu.VMEM((DW, HW + 2 * PADL), jnp.float32)],
        compiler_params=pltpu.CompilerParams(
            dimension_semantics=("parallel",)),
    )(x, *plist)

    return out.reshape(N, C, H, W)


def reference(x, params):
    """Pure-JAX NCHW reference mirroring the PyTorch module."""
    ln_w, ln_b, w1, b1, wdw, b2, wsca, bsca, w3, b3, beta = params
    N, C, H, W = x.shape
    DW = 2 * C
    mu = jnp.mean(x, axis=1, keepdims=True)
    var = jnp.mean((x - mu) ** 2, axis=1, keepdims=True)
    y = (x - mu) / jnp.sqrt(var + EPS)
    y = ln_w.reshape(1, C, 1, 1) * y + ln_b.reshape(1, C, 1, 1)
    y1 = jnp.einsum('nchw,dc->ndhw', y, w1) + b1.reshape(1, DW, 1, 1)
    yp = jnp.pad(y1, ((0, 0), (0, 0), (1, 1), (1, 1)))
    acc = jnp.zeros_like(y1)
    for i in range(3):
        for j in range(3):
            acc = acc + yp[:, :, i:i + H, j:j + W] * wdw[:, i * 3 + j].reshape(1, DW, 1, 1)
    y2 = acc + b2.reshape(1, DW, 1, 1)
    g = y2[:, :C] * y2[:, C:]
    pooled = jnp.mean(g, axis=(2, 3))                       # (N, C)
    s = pooled @ wsca.T + bsca.reshape(1, C)                # (N, C)
    g = g * s[:, :, None, None]
    y3 = jnp.einsum('nchw,dc->ndhw', g, w3) + b3.reshape(1, C, 1, 1)
    return x + y3 * beta.reshape(1, C, 1, 1)


def make_params(key, c):
    dw = 2 * c
    ks = jax.random.split(key, 11)
    scale = 0.2
    ln_w = 1.0 + scale * jax.random.normal(ks[0], (c, 1))
    ln_b = scale * jax.random.normal(ks[1], (c, 1))
    w1 = scale * jax.random.normal(ks[2], (dw, c))    # conv1 (out, in)
    b1 = scale * jax.random.normal(ks[3], (dw, 1))
    wdw = scale * jax.random.normal(ks[4], (dw, 9))   # depthwise 3x3 taps
    b2 = scale * jax.random.normal(ks[5], (dw, 1))
    wsca = scale * jax.random.normal(ks[6], (c, c))   # sca 1x1 conv (out, in)
    bsca = scale * jax.random.normal(ks[7], (c, 1))
    w3 = scale * jax.random.normal(ks[8], (c, c))     # conv3 (out, in)
    b3 = scale * jax.random.normal(ks[9], (c, 1))
    beta = 0.1 * jax.random.normal(ks[10], (c, 1))    # non-zero to exercise path
    return tuple(jnp.asarray(p, jnp.float32) for p in
                 (ln_w, ln_b, w1, b1, wdw, b2, wsca, bsca, w3, b3, beta))


if __name__ == "__main__":
    N, C, H, W = 2, 4, 16, 16
    key = jax.random.PRNGKey(0)
    kx, kp = jax.random.split(key)
    x = jax.random.normal(kx, (N, C, H, W), jnp.float32)
    params = make_params(kp, C)

    out = jax.block_until_ready(localcnn_block(x, params))
    ref = reference(x, params)

    assert out.shape == (N, C, H, W)
    max_err = float(jnp.max(jnp.abs(out - ref)))
    assert jnp.allclose(out, ref, atol=1e-3, rtol=1e-3), max_err

    print("KERNEL_OK")
</pallas_src>

<mosaic_0001>
module attributes {stable_mosaic.version = 11 : i64} {
  func.func @localcnn_kernel(%arg0: i32, %arg1: memref<1x4x256xf32, #tpu.memory_space<vmem>>, %arg2: memref<2x256xf32, #tpu.memory_space<vmem>>, %arg3: memref<4x1xf32, #tpu.memory_space<vmem>>, %arg4: memref<4x1xf32, #tpu.memory_space<vmem>>, %arg5: memref<8x4xf32, #tpu.memory_space<vmem>>, %arg6: memref<8x1xf32, #tpu.memory_space<vmem>>, %arg7: memref<8x9xf32, #tpu.memory_space<vmem>>, %arg8: memref<8x1xf32, #tpu.memory_space<vmem>>, %arg9: memref<4x4xf32, #tpu.memory_space<vmem>>, %arg10: memref<4x1xf32, #tpu.memory_space<vmem>>, %arg11: memref<4x4xf32, #tpu.memory_space<vmem>>, %arg12: memref<4x1xf32, #tpu.memory_space<vmem>>, %arg13: memref<4x1xf32, #tpu.memory_space<vmem>>, %arg14: memref<1x4x256xf32, #tpu.memory_space<vmem>>, %arg15: memref<8x512xf32, #tpu.memory_space<vmem>>) attributes {dimension_semantics = [#tpu.dimension_semantics<parallel>], iteration_bounds = array<i64: 2>, scalar_prefetch = 0 : i64, scratch_operands = 1 : i64, tpu.core_type = #tpu.core_type<tc>, window_params = [{transform_indices = @transform_0, window_bounds = array<i64: 1, 4, 256>}, {pipeline_mode = #tpu.pipeline_mode<synchronous>, transform_indices = @transform_1, window_bounds = array<i64: 2, 256>}, {pipeline_mode = #tpu.pipeline_mode<synchronous>, transform_indices = @transform_2, window_bounds = array<i64: 4, 1>}, {pipeline_mode = #tpu.pipeline_mode<synchronous>, transform_indices = @transform_3, window_bounds = array<i64: 4, 1>}, {pipeline_mode = #tpu.pipeline_mode<synchronous>, transform_indices = @transform_4, window_bounds = array<i64: 8, 4>}, {pipeline_mode = #tpu.pipeline_mode<synchronous>, transform_indices = @transform_5, window_bounds = array<i64: 8, 1>}, {pipeline_mode = #tpu.pipeline_mode<synchronous>, transform_indices = @transform_6, window_bounds = array<i64: 8, 9>}, {pipeline_mode = #tpu.pipeline_mode<synchronous>, transform_indices = @transform_7, window_bounds = array<i64: 8, 1>}, {pipeline_mode = #tpu.pipeline_mode<synchronous>, transform_indices = @transform_8, window_bounds = array<i64: 4, 4>}, {pipeline_mode = #tpu.pipeline_mode<synchronous>, transform_indices = @transform_9, window_bounds = array<i64: 4, 1>}, {pipeline_mode = #tpu.pipeline_mode<synchronous>, transform_indices = @transform_10, window_bounds = array<i64: 4, 4>}, {pipeline_mode = #tpu.pipeline_mode<synchronous>, transform_indices = @transform_11, window_bounds = array<i64: 4, 1>}, {pipeline_mode = #tpu.pipeline_mode<synchronous>, transform_indices = @transform_12, window_bounds = array<i64: 4, 1>}, {transform_indices = @transform_13, window_bounds = array<i64: 1, 4, 256>}]} {
    %c0 = arith.constant 0 : index
    %c0_0 = arith.constant 0 : index
    %c0_1 = arith.constant 0 : index
    %0 = vector.load %arg1[%c0, %c0_0, %c0_1] : memref<1x4x256xf32, #tpu.memory_space<vmem>>, vector<1x4x256xf32>
    %1 = vector.shape_cast %0 : vector<1x4x256xf32> to vector<4x256xf32>
    %cst = arith.constant dense<0.000000e+00> : vector<256xf32>
    %2 = vector.multi_reduction <add>, %1, %cst [0] : vector<4x256xf32> to vector<256xf32>
    %3 = vector.shape_cast %2 : vector<256xf32> to vector<1x256xf32>
    %cst_2 = arith.constant 2.500000e-01 : f32
    %4 = vector.broadcast %cst_2 : f32 to vector<1x256xf32>
    %5 = arith.mulf %3, %4 : vector<1x256xf32>
    %6 = vector.broadcast %5 : vector<1x256xf32> to vector<4x256xf32>
    %7 = arith.subf %1, %6 : vector<4x256xf32>
    %8 = arith.mulf %7, %7 : vector<4x256xf32>
    %cst_3 = arith.constant dense<0.000000e+00> : vector<256xf32>
    %9 = vector.multi_reduction <add>, %8, %cst_3 [0] : vector<4x256xf32> to vector<256xf32>
    %10 = vector.shape_cast %9 : vector<256xf32> to vector<1x256xf32>
    %cst_4 = arith.constant 2.500000e-01 : f32
    %11 = vector.broadcast %cst_4 : f32 to vector<1x256xf32>
    %12 = arith.mulf %10, %11 : vector<1x256xf32>
    %cst_5 = arith.constant 9.99999997E-7 : f32
    %13 = vector.broadcast %cst_5 : f32 to vector<1x256xf32>
    %14 = arith.addf %12, %13 : vector<1x256xf32>
    %15 = math.rsqrt %14 : vector<1x256xf32>
    %16 = vector.broadcast %15 : vector<1x256xf32> to vector<4x256xf32>
    %17 = arith.mulf %7, %16 : vector<4x256xf32>
    %c0_6 = arith.constant 0 : index
    %c0_7 = arith.constant 0 : index
    %18 = vector.load %arg3[%c0_6, %c0_7] : memref<4x1xf32, #tpu.memory_space<vmem>>, vector<4x1xf32>
    %19 = vector.broadcast %18 : vector<4x1xf32> to vector<4x256xf32>
    %20 = arith.mulf %17, %19 : vector<4x256xf32>
    %c0_8 = arith.constant 0 : index
    %c0_9 = arith.constant 0 : index
    %21 = vector.load %arg4[%c0_8, %c0_9] : memref<4x1xf32, #tpu.memory_space<vmem>>, vector<4x1xf32>
    %22 = vector.broadcast %21 : vector<4x1xf32> to vector<4x256xf32>
    %23 = arith.addf %20, %22 : vector<4x256xf32>
    %c0_10 = arith.constant 0 : index
    %c0_11 = arith.constant 0 : index
    %24 = vector.load %arg5[%c0_10, %c0_11] : memref<8x4xf32, #tpu.memory_space<vmem>>, vector<8x4xf32>
    %25 = vector.extract_strided_slice %24 {offsets = [0, 0], sizes = [8, 1], strides = [1, 1]} : vector<8x4xf32> to vector<8x1xf32>
    %26 = vector.extract_strided_slice %23 {offsets = [0, 0], sizes = [1, 256], strides = [1, 1]} : vector<4x256xf32> to vector<1x256xf32>
    %27 = vector.broadcast %25 : vector<8x1xf32> to vector<8x256xf32>
    %28 = vector.broadcast %26 : vector<1x256xf32> to vector<8x256xf32>
    %29 = arith.mulf %27, %28 : vector<8x256xf32>
    %30 = vector.extract_strided_slice %24 {offsets = [0, 1], sizes = [8, 1], strides = [1, 1]} : vector<8x4xf32> to vector<8x1xf32>
    %31 = vector.extract_strided_slice %23 {offsets = [1, 0], sizes = [1, 256], strides = [1, 1]} : vector<4x256xf32> to vector<1x256xf32>
    %32 = vector.broadcast %30 : vector<8x1xf32> to vector<8x256xf32>
    %33 = vector.broadcast %31 : vector<1x256xf32> to vector<8x256xf32>
    %34 = arith.mulf %32, %33 : vector<8x256xf32>
    %35 = arith.addf %29, %34 : vector<8x256xf32>
    %36 = vector.extract_strided_slice %24 {offsets = [0, 2], sizes = [8, 1], strides = [1, 1]} : vector<8x4xf32> to vector<8x1xf32>
    %37 = vector.extract_strided_slice %23 {offsets = [2, 0], sizes = [1, 256], strides = [1, 1]} : vector<4x256xf32> to vector<1x256xf32>
    %38 = vector.broadcast %36 : vector<8x1xf32> to vector<8x256xf32>
    %39 = vector.broadcast %37 : vector<1x256xf32> to vector<8x256xf32>
    %40 = arith.mulf %38, %39 : vector<8x256xf32>
    %41 = arith.addf %35, %40 : vector<8x256xf32>
    %42 = vector.extract_strided_slice %24 {offsets = [0, 3], sizes = [8, 1], strides = [1, 1]} : vector<8x4xf32> to vector<8x1xf32>
    %43 = vector.extract_strided_slice %23 {offsets = [3, 0], sizes = [1, 256], strides = [1, 1]} : vector<4x256xf32> to vector<1x256xf32>
    %44 = vector.broadcast %42 : vector<8x1xf32> to vector<8x256xf32>
    %45 = vector.broadcast %43 : vector<1x256xf32> to vector<8x256xf32>
    %46 = arith.mulf %44, %45 : vector<8x256xf32>
    %47 = arith.addf %41, %46 : vector<8x256xf32>
    %c0_12 = arith.constant 0 : index
    %c0_13 = arith.constant 0 : index
    %48 = vector.load %arg6[%c0_12, %c0_13] : memref<8x1xf32, #tpu.memory_space<vmem>>, vector<8x1xf32>
    %49 = vector.broadcast %48 : vector<8x1xf32> to vector<8x256xf32>
    %50 = arith.addf %47, %49 : vector<8x256xf32>
    %cst_14 = arith.constant 0.000000e+00 : f32
    %51 = vector.broadcast %cst_14 : f32 to vector<8x128xf32>
    %c0_15 = arith.constant 0 : index
    %c0_16 = arith.constant 0 : index
    %52 = vector.load %arg15[%c0_15, %c0_16] : memref<8x512xf32, #tpu.memory_space<vmem>>, vector<8x128xf32>
    tpu.vector_store %arg15[%c0_15, %c0_16], %51 {strides = array<i32>} : memref<8x512xf32, #tpu.memory_space<vmem>>, vector<8x128xf32>,
    %c0_17 = arith.constant 0 : index
    %c384 = arith.constant 384 : index
    %53 = vector.load %arg15[%c0_17, %c384] : memref<8x512xf32, #tpu.memory_space<vmem>>, vector<8x128xf32>
    tpu.vector_store %arg15[%c0_17, %c384], %51 {strides = array<i32>} : memref<8x512xf32, #tpu.memory_space<vmem>>, vector<8x128xf32>,
    %c0_18 = arith.constant 0 : index
    %c128 = arith.constant 128 : index
    %54 = vector.load %arg15[%c0_18, %c128] : memref<8x512xf32, #tpu.memory_space<vmem>>, vector<8x256xf32>
    tpu.vector_store %arg15[%c0_18, %c128], %50 {strides = array<i32>} : memref<8x512xf32, #tpu.memory_space<vmem>>, vector<8x256xf32>,
    %c0_19 = arith.constant 0 : index
    %c0_20 = arith.constant 0 : index
    %55 = vector.load %arg2[%c0_19, %c0_20] : memref<2x256xf32, #tpu.memory_space<vmem>>, vector<2x256xf32>
    %56 = vector.extract_strided_slice %55 {offsets = [0, 0], sizes = [1, 256], strides = [1, 1]} : vector<2x256xf32> to vector<1x256xf32>
    %57 = vector.extract_strided_slice %55 {offsets = [1, 0], sizes = [1, 256], strides = [1, 1]} : vector<2x256xf32> to vector<1x256xf32>
    %c0_21 = arith.constant 0 : index
    %c0_22 = arith.constant 0 : index
    %58 = vector.load %arg7[%c0_21, %c0_22] : memref<8x9xf32, #tpu.memory_space<vmem>>, vector<8x9xf32>
    %c0_23 = arith.constant 0 : index
    %c111 = arith.constant 111 : index
    %59 = vector.load %arg15[%c0_23, %c111] : memref<8x512xf32, #tpu.memory_space<vmem>>, vector<8x256xf32>
    %60 = vector.broadcast %56 : vector<1x256xf32> to vector<8x256xf32>
    %61 = arith.mulf %59, %60 : vector<8x256xf32>
    %62 = vector.extract_strided_slice %58 {offsets = [0, 0], sizes = [8, 1], strides = [1, 1]} : vector<8x9xf32> to vector<8x1xf32>
    %63 = vector.broadcast %62 : vector<8x1xf32> to vector<8x256xf32>
    %64 = arith.mulf %61, %63 : vector<8x256xf32>
    %c0_24 = arith.constant 0 : index
    %c112 = arith.constant 112 : index
    %65 = vector.load %arg15[%c0_24, %c112] : memref<8x512xf32, #tpu.memory_space<vmem>>, vector<8x256xf32>
    %66 = vector.extract_strided_slice %58 {offsets = [0, 1], sizes = [8, 1], strides = [1, 1]} : vector<8x9xf32> to vector<8x1xf32>
    %67 = vector.broadcast %66 : vector<8x1xf32> to vector<8x256xf32>
    %68 = arith.mulf %65, %67 : vector<8x256xf32>
    %69 = arith.addf %64, %68 : vector<8x256xf32>
    %c0_25 = arith.constant 0 : index
    %c113 = arith.constant 113 : index
    %70 = vector.load %arg15[%c0_25, %c113] : memref<8x512xf32, #tpu.memory_space<vmem>>, vector<8x256xf32>
    %71 = vector.broadcast %57 : vector<1x256xf32> to vector<8x256xf32>
    %72 = arith.mulf %70, %71 : vector<8x256xf32>
    %73 = vector.extract_strided_slice %58 {offsets = [0, 2], sizes = [8, 1], strides = [1, 1]} : vector<8x9xf32> to vector<8x1xf32>
    %74 = vector.broadcast %73 : vector<8x1xf32> to vector<8x256xf32>
    %75 = arith.mulf %72, %74 : vector<8x256xf32>
    %76 = arith.addf %69, %75 : vector<8x256xf32>
    %c0_26 = arith.constant 0 : index
    %c127 = arith.constant 127 : index
    %77 = vector.load %arg15[%c0_26, %c127] : memref<8x512xf32, #tpu.memory_space<vmem>>, vector<8x256xf32>
    %78 = vector.broadcast %56 : vector<1x256xf32> to vector<8x256xf32>
    %79 = arith.mulf %77, %78 : vector<8x256xf32>
    %80 = vector.extract_strided_slice %58 {offsets = [0, 3], sizes = [8, 1], strides = [1, 1]} : vector<8x9xf32> to vector<8x1xf32>
    %81 = vector.broadcast %80 : vector<8x1xf32> to vector<8x256xf32>
    %82 = arith.mulf %79, %81 : vector<8x256xf32>
    %83 = arith.addf %76, %82 : vector<8x256xf32>
    %c0_27 = arith.constant 0 : index
    %c128_28 = arith.constant 128 : index
    %84 = vector.load %arg15[%c0_27, %c128_28] : memref<8x512xf32, #tpu.memory_space<vmem>>, vector<8x256xf32>
    %85 = vector.extract_strided_slice %58 {offsets = [0, 4], sizes = [8, 1], strides = [1, 1]} : vector<8x9xf32> to vector<8x1xf32>
    %86 = vector.broadcast %85 : vector<8x1xf32> to vector<8x256xf32>
    %87 = arith.mulf %84, %86 : vector<8x256xf32>
    %88 = arith.addf %83, %87 : vector<8x256xf32>
    %c0_29 = arith.constant 0 : index
    %c129 = arith.constant 129 : index
    %89 = vector.load %arg15[%c0_29, %c129] : memref<8x512xf32, #tpu.memory_space<vmem>>, vector<8x256xf32>
    %90 = vector.broadcast %57 : vector<1x256xf32> to vector<8x256xf32>
    %91 = arith.mulf %89, %90 : vector<8x256xf32>
    %92 = vector.extract_strided_slice %58 {offsets = [0, 5], sizes = [8, 1], strides = [1, 1]} : vector<8x9xf32> to vector<8x1xf32>
    %93 = vector.broadcast %92 : vector<8x1xf32> to vector<8x256xf32>
    %94 = arith.mulf %91, %93 : vector<8x256xf32>
    %95 = arith.addf %88, %94 : vector<8x256xf32>
    %c0_30 = arith.constant 0 : index
    %c143 = arith.constant 143 : index
    %96 = vector.load %arg15[%c0_30, %c143] : memref<8x512xf32, #tpu.memory_space<vmem>>, vector<8x256xf32>
    %97 = vector.broadcast %56 : vector<1x256xf32> to vector<8x256xf32>
    %98 = arith.mulf %96, %97 : vector<8x256xf32>
    %99 = vector.extract_strided_slice %58 {offsets = [0, 6], sizes = [8, 1], strides = [1, 1]} : vector<8x9xf32> to vector<8x1xf32>
    %100 = vector.broadcast %99 : vector<8x1xf32> to vector<8x256xf32>
    %101 = arith.mulf %98, %100 : vector<8x256xf32>
    %102 = arith.addf %95, %101 : vector<8x256xf32>
    %c0_31 = arith.constant 0 : index
    %c144 = arith.constant 144 : index
    %103 = vector.load %arg15[%c0_31, %c144] : memref<8x512xf32, #tpu.memory_space<vmem>>, vector<8x256xf32>
    %104 = vector.extract_strided_slice %58 {offsets = [0, 7], sizes = [8, 1], strides = [1, 1]} : vector<8x9xf32> to vector<8x1xf32>
    %105 = vector.broadcast %104 : vector<8x1xf32> to vector<8x256xf32>
    %106 = arith.mulf %103, %105 : vector<8x256xf32>
    %107 = arith.addf %102, %106 : vector<8x256xf32>
    %c0_32 = arith.constant 0 : index
    %c145 = arith.constant 145 : index
    %108 = vector.load %arg15[%c0_32, %c145] : memref<8x512xf32, #tpu.memory_space<vmem>>, vector<8x256xf32>
    %109 = vector.broadcast %57 : vector<1x256xf32> to vector<8x256xf32>
    %110 = arith.mulf %108, %109 : vector<8x256xf32>
    %111 = vector.extract_strided_slice %58 {offsets = [0, 8], sizes = [8, 1], strides = [1, 1]} : vector<8x9xf32> to vector<8x1xf32>
    %112 = vector.broadcast %111 : vector<8x1xf32> to vector<8x256xf32>
    %113 = arith.mulf %110, %112 : vector<8x256xf32>
    %114 = arith.addf %107, %113 : vector<8x256xf32>
    %c0_33 = arith.constant 0 : index
    %c0_34 = arith.constant 0 : index
    %115 = vector.load %arg8[%c0_33, %c0_34] : memref<8x1xf32, #tpu.memory_space<vmem>>, vector<8x1xf32>
    %116 = vector.broadcast %115 : vector<8x1xf32> to vector<8x256xf32>
    %117 = arith.addf %114, %116 : vector<8x256xf32>
    %118 = vector.extract_strided_slice %117 {offsets = [0, 0], sizes = [4, 256], strides = [1, 1]} : vector<8x256xf32> to vector<4x256xf32>
    %119 = vector.extract_strided_slice %117 {offsets = [4, 0], sizes = [4, 256], strides = [1, 1]} : vector<8x256xf32> to vector<4x256xf32>
    %120 = arith.mulf %118, %119 : vector<4x256xf32>
    %c0_35 = arith.constant 0 : index
    %c0_36 = arith.constant 0 : index
    %121 = vector.load %arg9[%c0_35, %c0_36] : memref<4x4xf32, #tpu.memory_space<vmem>>, vector<4x4xf32>
    %122 = vector.extract_strided_slice %121 {offsets = [0, 0], sizes = [4, 1], strides = [1, 1]} : vector<4x4xf32> to vector<4x1xf32>
    %123 = vector.extract_strided_slice %120 {offsets = [0, 0], sizes = [1, 256], strides = [1, 1]} : vector<4x256xf32> to vector<1x256xf32>
    %124 = vector.broadcast %122 : vector<4x1xf32> to vector<4x256xf32>
    %125 = vector.broadcast %123 : vector<1x256xf32> to vector<4x256xf32>
    %126 = arith.mulf %124, %125 : vector<4x256xf32>
    %127 = vector.extract_strided_slice %121 {offsets = [0, 1], sizes = [4, 1], strides = [1, 1]} : vector<4x4xf32> to vector<4x1xf32>
    %128 = vector.extract_strided_slice %120 {offsets = [1, 0], sizes = [1, 256], strides = [1, 1]} : vector<4x256xf32> to vector<1x256xf32>
    %129 = vector.broadcast %127 : vector<4x1xf32> to vector<4x256xf32>
    %130 = vector.broadcast %128 : vector<1x256xf32> to vector<4x256xf32>
    %131 = arith.mulf %129, %130 : vector<4x256xf32>
    %132 = arith.addf %126, %131 : vector<4x256xf32>
    %133 = vector.extract_strided_slice %121 {offsets = [0, 2], sizes = [4, 1], strides = [1, 1]} : vector<4x4xf32> to vector<4x1xf32>
    %134 = vector.extract_strided_slice %120 {offsets = [2, 0], sizes = [1, 256], strides = [1, 1]} : vector<4x256xf32> to vector<1x256xf32>
    %135 = vector.broadcast %133 : vector<4x1xf32> to vector<4x256xf32>
    %136 = vector.broadcast %134 : vector<1x256xf32> to vector<4x256xf32>
    %137 = arith.mulf %135, %136 : vector<4x256xf32>
    %138 = arith.addf %132, %137 : vector<4x256xf32>
    %139 = vector.extract_strided_slice %121 {offsets = [0, 3], sizes = [4, 1], strides = [1, 1]} : vector<4x4xf32> to vector<4x1xf32>
    %140 = vector.extract_strided_slice %120 {offsets = [3, 0], sizes = [1, 256], strides = [1, 1]} : vector<4x256xf32> to vector<1x256xf32>
    %141 = vector.broadcast %139 : vector<4x1xf32> to vector<4x256xf32>
    %142 = vector.broadcast %140 : vector<1x256xf32> to vector<4x256xf32>
    %143 = arith.mulf %141, %142 : vector<4x256xf32>
    %144 = arith.addf %138, %143 : vector<4x256xf32>
    %cst_37 = arith.constant dense<0.000000e+00> : vector<4xf32>
    %145 = vector.multi_reduction <add>, %144, %cst_37 [1] : vector<4x256xf32> to vector<4xf32>
    %146 = vector.shape_cast %145 : vector<4xf32> to vector<4x1xf32>
    %cst_38 = arith.constant 3.906250e-03 : f32
    %147 = vector.broadcast %cst_38 : f32 to vector<4x1xf32>
    %148 = arith.mulf %146, %147 : vector<4x1xf32>
    %c0_39 = arith.constant 0 : index
    %c0_40 = arith.constant 0 : index
    %149 = vector.load %arg10[%c0_39, %c0_40] : memref<4x1xf32, #tpu.memory_space<vmem>>, vector<4x1xf32>
    %150 = arith.addf %148, %149 : vector<4x1xf32>
    %151 = vector.broadcast %150 : vector<4x1xf32> to vector<4x256xf32>
    %152 = arith.mulf %120, %151 : vector<4x256xf32>
    %c0_41 = arith.constant 0 : index
    %c0_42 = arith.constant 0 : index
    %153 = vector.load %arg11[%c0_41, %c0_42] : memref<4x4xf32, #tpu.memory_space<vmem>>, vector<4x4xf32>
    %154 = vector.extract_strided_slice %153 {offsets = [0, 0], sizes = [4, 1], strides = [1, 1]} : vector<4x4xf32> to vector<4x1xf32>
    %155 = vector.extract_strided_slice %152 {offsets = [0, 0], sizes = [1, 256], strides = [1, 1]} : vector<4x256xf32> to vector<1x256xf32>
    %156 = vector.broadcast %154 : vector<4x1xf32> to vector<4x256xf32>
    %157 = vector.broadcast %155 : vector<1x256xf32> to vector<4x256xf32>
    %158 = arith.mulf %156, %157 : vector<4x256xf32>
    %159 = vector.extract_strided_slice %153 {offsets = [0, 1], sizes = [4, 1], strides = [1, 1]} : vector<4x4xf32> to vector<4x1xf32>
    %160 = vector.extract_strided_slice %152 {offsets = [1, 0], sizes = [1, 256], strides = [1, 1]} : vector<4x256xf32> to vector<1x256xf32>
    %161 = vector.broadcast %159 : vector<4x1xf32> to vector<4x256xf32>
    %162 = vector.broadcast %160 : vector<1x256xf32> to vector<4x256xf32>
    %163 = arith.mulf %161, %162 : vector<4x256xf32>
    %164 = arith.addf %158, %163 : vector<4x256xf32>
    %165 = vector.extract_strided_slice %153 {offsets = [0, 2], sizes = [4, 1], strides = [1, 1]} : vector<4x4xf32> to vector<4x1xf32>
    %166 = vector.extract_strided_slice %152 {offsets = [2, 0], sizes = [1, 256], strides = [1, 1]} : vector<4x256xf32> to vector<1x256xf32>
    %167 = vector.broadcast %165 : vector<4x1xf32> to vector<4x256xf32>
    %168 = vector.broadcast %166 : vector<1x256xf32> to vector<4x256xf32>
    %169 = arith.mulf %167, %168 : vector<4x256xf32>
    %170 = arith.addf %164, %169 : vector<4x256xf32>
    %171 = vector.extract_strided_slice %153 {offsets = [0, 3], sizes = [4, 1], strides = [1, 1]} : vector<4x4xf32> to vector<4x1xf32>
    %172 = vector.extract_strided_slice %152 {offsets = [3, 0], sizes = [1, 256], strides = [1, 1]} : vector<4x256xf32> to vector<1x256xf32>
    %173 = vector.broadcast %171 : vector<4x1xf32> to vector<4x256xf32>
    %174 = vector.broadcast %172 : vector<1x256xf32> to vector<4x256xf32>
    %175 = arith.mulf %173, %174 : vector<4x256xf32>
    %176 = arith.addf %170, %175 : vector<4x256xf32>
    %c0_43 = arith.constant 0 : index
    %c0_44 = arith.constant 0 : index
    %177 = vector.load %arg12[%c0_43, %c0_44] : memref<4x1xf32, #tpu.memory_space<vmem>>, vector<4x1xf32>
    %178 = vector.broadcast %177 : vector<4x1xf32> to vector<4x256xf32>
    %179 = arith.addf %176, %178 : vector<4x256xf32>
    %c0_45 = arith.constant 0 : index
    %c0_46 = arith.constant 0 : index
    %180 = vector.load %arg13[%c0_45, %c0_46] : memref<4x1xf32, #tpu.memory_space<vmem>>, vector<4x1xf32>
    %181 = vector.broadcast %180 : vector<4x1xf32> to vector<4x256xf32>
    %182 = arith.mulf %179, %181 : vector<4x256xf32>
    %183 = arith.addf %1, %182 : vector<4x256xf32>
    %c0_47 = arith.constant 0 : index
    %c0_48 = arith.constant 0 : index
    %c0_49 = arith.constant 0 : index
    %184 = vector.load %arg14[%c0_47, %c0_48, %c0_49] : memref<1x4x256xf32, #tpu.memory_space<vmem>>, vector<1x4x256xf32>
    %185 = vector.shape_cast %184 : vector<1x4x256xf32> to vector<4x256xf32>
    %186 = vector.shape_cast %183 : vector<4x256xf32> to vector<1x4x256xf32>
    tpu.vector_store %arg14[%c0_47, %c0_48, %c0_49], %186 {strides = array<i32>} : memref<1x4x256xf32, #tpu.memory_space<vmem>>, vector<1x4x256xf32>,
    return
  }
  func.func @transform_0(%arg0: i32) -> (i32, i32, i32) {
    %c0_i32 = arith.constant 0 : i32
    %c0_i32_0 = arith.constant 0 : i32
    %c0_i32_1 = arith.constant 0 : i32
    return %arg0, %c0_i32, %c0_i32_0 : i32, i32, i32
  }
  func.func @transform_1(%arg0: i32) -> (i32, i32) {
    %c0_i32 = arith.constant 0 : i32
    %c0_i32_0 = arith.constant 0 : i32
    %c0_i32_1 = arith.constant 0 : i32
    return %c0_i32, %c0_i32_0 : i32, i32
  }
  func.func @transform_2(%arg0: i32) -> (i32, i32) {
    %c0_i32 = arith.constant 0 : i32
    %c0_i32_0 = arith.constant 0 : i32
    %c0_i32_1 = arith.constant 0 : i32
    return %c0_i32, %c0_i32_0 : i32, i32
  }
  func.func @transform_3(%arg0: i32) -> (i32, i32) {
    %c0_i32 = arith.constant 0 : i32
    %c0_i32_0 = arith.constant 0 : i32
    %c0_i32_1 = arith.constant 0 : i32
    return %c0_i32, %c0_i32_0 : i32, i32
  }
  func.func @transform_4(%arg0: i32) -> (i32, i32) {
    %c0_i32 = arith.constant 0 : i32
    %c0_i32_0 = arith.constant 0 : i32
    %c0_i32_1 = arith.constant 0 : i32
    return %c0_i32, %c0_i32_0 : i32, i32
  }
  func.func @transform_5(%arg0: i32) -> (i32, i32) {
    %c0_i32 = arith.constant 0 : i32
    %c0_i32_0 = arith.constant 0 : i32
    %c0_i32_1 = arith.constant 0 : i32
    return %c0_i32, %c0_i32_0 : i32, i32
  }
  func.func @transform_6(%arg0: i32) -> (i32, i32) {
    %c0_i32 = arith.constant 0 : i32
    %c0_i32_0 = arith.constant 0 : i32
    %c0_i32_1 = arith.constant 0 : i32
    return %c0_i32, %c0_i32_0 : i32, i32
  }
  func.func @transform_7(%arg0: i32) -> (i32, i32) {
    %c0_i32 = arith.constant 0 : i32
    %c0_i32_0 = arith.constant 0 : i32
    %c0_i32_1 = arith.constant 0 : i32
    return %c0_i32, %c0_i32_0 : i32, i32
  }
  func.func @transform_8(%arg0: i32) -> (i32, i32) {
    %c0_i32 = arith.constant 0 : i32
    %c0_i32_0 = arith.constant 0 : i32
    %c0_i32_1 = arith.constant 0 : i32
    return %c0_i32, %c0_i32_0 : i32, i32
  }
  func.func @transform_9(%arg0: i32) -> (i32, i32) {
    %c0_i32 = arith.constant 0 : i32
    %c0_i32_0 = arith.constant 0 : i32
    %c0_i32_1 = arith.constant 0 : i32
    return %c0_i32, %c0_i32_0 : i32, i32
  }
  func.func @transform_10(%arg0: i32) -> (i32, i32) {
    %c0_i32 = arith.constant 0 : i32
    %c0_i32_0 = arith.constant 0 : i32
    %c0_i32_1 = arith.constant 0 : i32
    return %c0_i32, %c0_i32_0 : i32, i32
  }
  func.func @transform_11(%arg0: i32) -> (i32, i32) {
    %c0_i32 = arith.constant 0 : i32
    %c0_i32_0 = arith.constant 0 : i32
    %c0_i32_1 = arith.constant 0 : i32
    return %c0_i32, %c0_i32_0 : i32, i32
  }
  func.func @transform_12(%arg0: i32) -> (i32, i32) {
    %c0_i32 = arith.constant 0 : i32
    %c0_i32_0 = arith.constant 0 : i32
    %c0_i32_1 = arith.constant 0 : i32
    return %c0_i32, %c0_i32_0 : i32, i32
  }
  func.func @transform_13(%arg0: i32) -> (i32, i32, i32) {
    %c0_i32 = arith.constant 0 : i32
    %c0_i32_0 = arith.constant 0 : i32
    %c0_i32_1 = arith.constant 0 : i32
    return %arg0, %c0_i32, %c0_i32_0 : i32, i32, i32
  }
}

</mosaic_0001>

<llo_original>
// kernel: tpu_custom_call.1
$region0: #{tpu_custom_call.1}
  #allocation0 [shape = 'u32[]', space=smem, size = 0x4, offset = 0x4, fixed_abs, tag = 'smem constant byte address 0x4 - core index']
  #allocation1 [shape = 'u32[144,128]{1,0:T(1,128)}', space=vmem, size = 0x12000, scoped, tag = 'internal scratch']
  #allocation2 [shape = 'f32[8,512]{1,0:T(8,128)}', space=vmem, size = 0x4000, scoped, tag = 'scratch operand']
  %s0 = inlined_call_operand.vmem [shape: f32[2,4,256], index: 0, kind: input, shape index: {}]
  %s1 = inlined_call_operand.vmem [shape: f32[2,256], index: 1, kind: input, shape index: {}]
  %s2 = inlined_call_operand.vmem [shape: f32[4,1], index: 2, kind: input, shape index: {}]
  %s3 = inlined_call_operand.vmem [shape: f32[4,1], index: 3, kind: input, shape index: {}]
  %s4 = inlined_call_operand.vmem [shape: f32[8,4], index: 4, kind: input, shape index: {}]
  %s5 = inlined_call_operand.vmem [shape: f32[8,1], index: 5, kind: input, shape index: {}]
  %s6 = inlined_call_operand.vmem [shape: f32[8,9], index: 6, kind: input, shape index: {}]
  %s7 = inlined_call_operand.vmem [shape: f32[8,1], index: 7, kind: input, shape index: {}]
  %s8 = inlined_call_operand.vmem [shape: f32[4,4], index: 8, kind: input, shape index: {}]
  %s9 = inlined_call_operand.vmem [shape: f32[4,1], index: 9, kind: input, shape index: {}]
  %s10 = inlined_call_operand.vmem [shape: f32[4,4], index: 10, kind: input, shape index: {}]
  %s11 = inlined_call_operand.vmem [shape: f32[4,1], index: 11, kind: input, shape index: {}]
  %s12 = inlined_call_operand.vmem [shape: f32[4,1], index: 12, kind: input, shape index: {}]
  %s13 = inlined_call_operand.hbm [shape: f32[2,4,256], index: 13, kind: output, shape index: {}]
  %s14 = sld [smem:[#allocation0]]
  $region85: #{tpu_custom_call.1} parent=0
    _
  %s16 = ssub.s32 1, %s14
  %s17 = scalar_select 0, %s16, %s14
  $region1: #{tpu_custom_call.1} parent=0
    #allocation3 [shape = 'u8[8192]{0}', space=vmem, size = 0x2000, scoped, tag = 'output window, operand 0']
    #allocation4 [shape = 's32[2]{0}', space=sflag, size = 0x8, scoped, tag = 'scoped memory for tpu_custom_call.1']
    %18 = vsyncpa [#allocation4], 0
    %s19 = scalar_lea.sflag [#allocation4], 1
    %20 = vsyncpa %s19, 0
    loop: start=0, step=1, limit=4
    $region2: #{tpu_custom_call.1} parent=1 // loop_pre_header
      _
    $region3: #{tpu_custom_call.1} parent=1 // loop_header
      %s22 = sphi 0, %s26
      %p23 = scmp.ge.s32.totalorder %s22, 4
      %s32 = sphi 0, %s34
      %s35 = sphi 0, %s32
      %s36 = sphi 0, %s35
      %s52 = sphi 0, %s36
      %s56 = sphi 0, %s56
      %s58 = sphi 0, %s56
      %s59 = sphi 0, %s58
      %s73 = sphi 0, %s59
      %s77 = sphi 0, %s77
      %s79 = sphi 0, %s77
      %s80 = sphi 0, %s79
      %s94 = sphi 0, %s80
      %s98 = sphi 0, %s98
      %s100 = sphi 0, %s98
      %s101 = sphi 0, %s100
      %s115 = sphi 0, %s101
      %s119 = sphi 0, %s119
      %s121 = sphi 0, %s119
      %s122 = sphi 0, %s121
      %s136 = sphi 0, %s122
      %s140 = sphi 0, %s140
      %s142 = sphi 0, %s140
      %s143 = sphi 0, %s142
      %s157 = sphi 0, %s143
      %s161 = sphi 0, %s161
      %s163 = sphi 0, %s161
      %s164 = sphi 0, %s163
      %s178 = sphi 0, %s164
      %s182 = sphi 0, %s182
      %s184 = sphi 0, %s182
      %s185 = sphi 0, %s184
      %s199 = sphi 0, %s185
      %s203 = sphi 0, %s203
      %s205 = sphi 0, %s203
      %s206 = sphi 0, %s205
      %s220 = sphi 0, %s206
      %s224 = sphi 0, %s224
      %s226 = sphi 0, %s224
      %s227 = sphi 0, %s226
      %s241 = sphi 0, %s227
      %s245 = sphi 0, %s245
      %s247 = sphi 0, %s245
      %s248 = sphi 0, %s247
      %s262 = sphi 0, %s248
      %s266 = sphi 0, %s266
      %s268 = sphi 0, %s266
      %s269 = sphi 0, %s268
      %s283 = sphi 0, %s269
      %s287 = sphi 0, %s287
      %s289 = sphi 0, %s287
      %s290 = sphi 0, %s289
      %s304 = sphi 0, %s290
      %s310 = sphi 0, %s312
      %s313 = sphi 0, %s310
      %s314 = sphi 0, %s313
      %s330 = sphi 0, %s314
    $region4: #{tpu_custom_call.1} parent=1 // loop_header_branch
      %25 = sbr.rel (%p23) target = $region8
    $region5: #{tpu_custom_call.1} parent=1 // loop_body
      %s27 = ssub.s32 %s22, 1
      %s28 = ssub.s32 %s22, 2
      %s29 = sadd.s32 %s22, 1
      %s30 = ssub.s32 %s22, %s29
      %p31 = scmp.eq.s32.totalorder %s30, 0
      %s33 = sadd.s32 %s32, 1
      %s34 = scalar_select %p31, %s32, %s33
      %p37 = pneg %p31
      %p38 = scmp.eq.s32.totalorder %s22, 1
      %p39 = por %p37, %p38
      %p40 = scmp.ne.s32.totalorder %s32, %s35
      %p41 = scmp.eq.s32.totalorder %s22, 0
      %p42 = por %p40, %p41
      %p43 = scmp.ne.s32.totalorder %s32, %s35
      %p44 = scmp.eq.s32.totalorder %s27, 1
      %p45 = por %p43, %p44
      %p46 = scmp.ne.s32.totalorder %s35, %s36
      %p47 = scmp.eq.s32.totalorder %s27, 0
      %p48 = por %p46, %p47
      %p49 = scmp.ne.s32.totalorder %s35, %s36
      %p50 = scmp.eq.s32.totalorder %s28, 1
      %p51 = por %p49, %p50
      %p53 = scmp.ne.s32.totalorder %s36, %s52
      %p54 = scmp.eq.s32.totalorder %s28, 0
      %p55 = por %p53, %p54
      %s57 = sadd.s32 %s56, 1
      %p60 = scmp.eq.s32.totalorder %s22, 1
      %p61 = scmp.ne.s32.totalorder %s56, %s58
      %p62 = scmp.eq.s32.totalorder %s22, 0
      %p63 = por %p61, %p62
      %p64 = scmp.ne.s32.totalorder %s56, %s58
      %p65 = scmp.eq.s32.totalorder %s27, 1
      %p66 = por %p64, %p65
      %p67 = scmp.ne.s32.totalorder %s58, %s59
      %p68 = scmp.eq.s32.totalorder %s27, 0
      %p69 = por %p67, %p68
      %p70 = scmp.ne.s32.totalorder %s58, %s59
      %p71 = scmp.eq.s32.totalorder %s28, 1
      %p72 = por %p70, %p71
      %p74 = scmp.ne.s32.totalorder %s59, %s73
      %p75 = scmp.eq.s32.totalorder %s28, 0
      %p76 = por %p74, %p75
      %s78 = sadd.s32 %s77, 1
      %p81 = scmp.eq.s32.totalorder %s22, 1
      %p82 = scmp.ne.s32.totalorder %s77, %s79
      %p83 = scmp.eq.s32.totalorder %s22, 0
      %p84 = por %p82, %p83
      %p85 = scmp.ne.s32.totalorder %s77, %s79
      %p86 = scmp.eq.s32.totalorder %s27, 1
      %p87 = por %p85, %p86
      %p88 = scmp.ne.s32.totalorder %s79, %s80
      %p89 = scmp.eq.s32.totalorder %s27, 0
      %p90 = por %p88, %p89
      %p91 = scmp.ne.s32.totalorder %s79, %s80
      %p92 = scmp.eq.s32.totalorder %s28, 1
      %p93 = por %p91, %p92
      %p95 = scmp.ne.s32.totalorder %s80, %s94
      %p96 = scmp.eq.s32.totalorder %s28, 0
      %p97 = por %p95, %p96
      %s99 = sadd.s32 %s98, 1
      %p102 = scmp.eq.s32.totalorder %s22, 1
      %p103 = scmp.ne.s32.totalorder %s98, %s100
      %p104 = scmp.eq.s32.totalorder %s22, 0
      %p105 = por %p103, %p104
      %p106 = scmp.ne.s32.totalorder %s98, %s100
      %p107 = scmp.eq.s32.totalorder %s27, 1
      %p108 = por %p106, %p107
      %p109 = scmp.ne.s32.totalorder %s100, %s101
      %p110 = scmp.eq.s32.totalorder %s27, 0
      %p111 = por %p109, %p110
      %p112 = scmp.ne.s32.totalorder %s100, %s101
      %p113 = scmp.eq.s32.totalorder %s28, 1
      %p114 = por %p112, %p113
      %p116 = scmp.ne.s32.totalorder %s101, %s115
      %p117 = scmp.eq.s32.totalorder %s28, 0
      %p118 = por %p116, %p117
      %s120 = sadd.s32 %s119, 1
      %p123 = scmp.eq.s32.totalorder %s22, 1
      %p124 = scmp.ne.s32.totalorder %s119, %s121
      %p125 = scmp.eq.s32.totalorder %s22, 0
      %p126 = por %p124, %p125
      %p127 = scmp.ne.s32.totalorder %s119, %s121
      %p128 = scmp.eq.s32.totalorder %s27, 1
      %p129 = por %p127, %p128
      %p130 = scmp.ne.s32.totalorder %s121, %s122
      %p131 = scmp.eq.s32.totalorder %s27, 0
      %p132 = por %p130, %p131
      %p133 = scmp.ne.s32.totalorder %s121, %s122
      %p134 = scmp.eq.s32.totalorder %s28, 1
      %p135 = por %p133, %p134
      %p137 = scmp.ne.s32.totalorder %s122, %s136
      %p138 = scmp.eq.s32.totalorder %s28, 0
      %p139 = por %p137, %p138
      %s141 = sadd.s32 %s140, 1
      %p144 = scmp.eq.s32.totalorder %s22, 1
      %p145 = scmp.ne.s32.totalorder %s140, %s142
      %p146 = scmp.eq.s32.totalorder %s22, 0
      %p147 = por %p145, %p146
      %p148 = scmp.ne.s32.totalorder %s140, %s142
      %p149 = scmp.eq.s32.totalorder %s27, 1
      %p150 = por %p148, %p149
      %p151 = scmp.ne.s32.totalorder %s142, %s143
      %p152 = scmp.eq.s32.totalorder %s27, 0
      %p153 = por %p151, %p152
      %p154 = scmp.ne.s32.totalorder %s142, %s143
      %p155 = scmp.eq.s32.totalorder %s28, 1
      %p156 = por %p154, %p155
      %p158 = scmp.ne.s32.totalorder %s143, %s157
      %p159 = scmp.eq.s32.totalorder %s28, 0
      %p160 = por %p158, %p159
      %s162 = sadd.s32 %s161, 1
      %p165 = scmp.eq.s32.totalorder %s22, 1
      %p166 = scmp.ne.s32.totalorder %s161, %s163
      %p167 = scmp.eq.s32.totalorder %s22, 0
      %p168 = por %p166, %p167
      %p169 = scmp.ne.s32.totalorder %s161, %s163
      %p170 = scmp.eq.s32.totalorder %s27, 1
      %p171 = por %p169, %p170
      %p172 = scmp.ne.s32.totalorder %s163, %s164
      %p173 = scmp.eq.s32.totalorder %s27, 0
      %p174 = por %p172, %p173
      %p175 = scmp.ne.s32.totalorder %s163, %s164
      %p176 = scmp.eq.s32.totalorder %s28, 1
      %p177 = por %p175, %p176
      %p179 = scmp.ne.s32.totalorder %s164, %s178
      %p180 = scmp.eq.s32.totalorder %s28, 0
      %p181 = por %p179, %p180
      %s183 = sadd.s32 %s182, 1
      %p186 = scmp.eq.s32.totalorder %s22, 1
      %p187 = scmp.ne.s32.totalorder %s182, %s184
      %p188 = scmp.eq.s32.totalorder %s22, 0
      %p189 = por %p187, %p188
      %p190 = scmp.ne.s32.totalorder %s182, %s184
      %p191 = scmp.eq.s32.totalorder %s27, 1
      %p192 = por %p190, %p191
      %p193 = scmp.ne.s32.totalorder %s184, %s185
      %p194 = scmp.eq.s32.totalorder %s27, 0
      %p195 = por %p193, %p194
      %p196 = scmp.ne.s32.totalorder %s184, %s185
      %p197 = scmp.eq.s32.totalorder %s28, 1
      %p198 = por %p196, %p197
      %p200 = scmp.ne.s32.totalorder %s185, %s199
      %p201 = scmp.eq.s32.totalorder %s28, 0
      %p202 = por %p200, %p201
      %s204 = sadd.s32 %s203, 1
      %p207 = scmp.eq.s32.totalorder %s22, 1
      %p208 = scmp.ne.s32.totalorder %s203, %s205
      %p209 = scmp.eq.s32.totalorder %s22, 0
      %p210 = por %p208, %p209
      %p211 = scmp.ne.s32.totalorder %s203, %s205
      %p212 = scmp.eq.s32.totalorder %s27, 1
      %p213 = por %p211, %p212
      %p214 = scmp.ne.s32.totalorder %s205, %s206
      %p215 = scmp.eq.s32.totalorder %s27, 0
      %p216 = por %p214, %p215
      %p217 = scmp.ne.s32.totalorder %s205, %s206
      %p218 = scmp.eq.s32.totalorder %s28, 1
      %p219 = por %p217, %p218
      %p221 = scmp.ne.s32.totalorder %s206, %s220
      %p222 = scmp.eq.s32.totalorder %s28, 0
      %p223 = por %p221, %p222
      %s225 = sadd.s32 %s224, 1
      %p228 = scmp.eq.s32.totalorder %s22, 1
      %p229 = scmp.ne.s32.totalorder %s224, %s226
      %p230 = scmp.eq.s32.totalorder %s22, 0
      %p231 = por %p229, %p230
      %p232 = scmp.ne.s32.totalorder %s224, %s226
      %p233 = scmp.eq.s32.totalorder %s27, 1
      %p234 = por %p232, %p233
      %p235 = scmp.ne.s32.totalorder %s226, %s227
      %p236 = scmp.eq.s32.totalorder %s27, 0
      %p237 = por %p235, %p236
      %p238 = scmp.ne.s32.totalorder %s226, %s227
      %p239 = scmp.eq.s32.totalorder %s28, 1
      %p240 = por %p238, %p239
      %p242 = scmp.ne.s32.totalorder %s227, %s241
      %p243 = scmp.eq.s32.totalorder %s28, 0
      %p244 = por %p242, %p243
      %s246 = sadd.s32 %s245, 1
      %p249 = scmp.eq.s32.totalorder %s22, 1
      %p250 = scmp.ne.s32.totalorder %s245, %s247
      %p251 = scmp.eq.s32.totalorder %s22, 0
      %p252 = por %p250, %p251
      %p253 = scmp.ne.s32.totalorder %s245, %s247
      %p254 = scmp.eq.s32.totalorder %s27, 1
      %p255 = por %p253, %p254
      %p256 = scmp.ne.s32.totalorder %s247, %s248
      %p257 = scmp.eq.s32.totalorder %s27, 0
      %p258 = por %p256, %p257
      %p259 = scmp.ne.s32.totalorder %s247, %s248
      %p260 = scmp.eq.s32.totalorder %s28, 1
      %p261 = por %p259, %p260
      %p263 = scmp.ne.s32.totalorder %s248, %s262
      %p264 = scmp.eq.s32.totalorder %s28, 0
      %p265 = por %p263, %p264
      %s267 = sadd.s32 %s266, 1
      %p270 = scmp.eq.s32.totalorder %s22, 1
      %p271 = scmp.ne.s32.totalorder %s266, %s268
      %p272 = scmp.eq.s32.totalorder %s22, 0
      %p273 = por %p271, %p272
      %p274 = scmp.ne.s32.totalorder %s266, %s268
      %p275 = scmp.eq.s32.totalorder %s27, 1
      %p276 = por %p274, %p275
      %p277 = scmp.ne.s32.totalorder %s268, %s269
      %p278 = scmp.eq.s32.totalorder %s27, 0
      %p279 = por %p277, %p278
      %p280 = scmp.ne.s32.totalorder %s268, %s269
      %p281 = scmp.eq.s32.totalorder %s28, 1
      %p282 = por %p280, %p281
      %p284 = scmp.ne.s32.totalorder %s269, %s283
      %p285 = scmp.eq.s32.totalorder %s28, 0
      %p286 = por %p284, %p285
      %s288 = sadd.s32 %s287, 1
      %p291 = scmp.eq.s32.totalorder %s22, 1
      %p292 = scmp.ne.s32.totalorder %s287, %s289
      %p293 = scmp.eq.s32.totalorder %s22, 0
      %p294 = por %p292, %p293
      %p295 = scmp.ne.s32.totalorder %s287, %s289
      %p296 = scmp.eq.s32.totalorder %s27, 1
      %p297 = por %p295, %p296
      %p298 = scmp.ne.s32.totalorder %s289, %s290
      %p299 = scmp.eq.s32.totalorder %s27, 0
      %p300 = por %p298, %p299
      %p301 = scmp.ne.s32.totalorder %s289, %s290
      %p302 = scmp.eq.s32.totalorder %s28, 1
      %p303 = por %p301, %p302
      %p305 = scmp.ne.s32.totalorder %s290, %s304
      %p306 = scmp.eq.s32.totalorder %s28, 0
      %p307 = por %p305, %p306
      %s308 = ssub.s32 %s22, %s29
      %p309 = scmp.eq.s32.totalorder %s308, 0
      %s311 = sadd.s32 %s310, 1
      %s312 = scalar_select %p309, %s310, %s311
      %p315 = pneg %p309
      %p316 = scmp.eq.s32.totalorder %s22, 1
      %p317 = por %p315, %p316
      %p318 = scmp.ne.s32.totalorder %s310, %s313
      %p319 = scmp.eq.s32.totalorder %s22, 0
      %p320 = por %p318, %p319
      %p321 = scmp.ne.s32.totalorder %s310, %s313
      %p322 = scmp.eq.s32.totalorder %s27, 1
      %p323 = por %p321, %p322
      %p324 = scmp.ne.s32.totalorder %s313, %s314
      %p325 = scmp.eq.s32.totalorder %s27, 0
      %p326 = por %p324, %p325
      %p327 = scmp.ne.s32.totalorder %s313, %s314
      %p328 = scmp.eq.s32.totalorder %s28, 1
      %p329 = por %p327, %p328
      %p331 = scmp.ne.s32.totalorder %s314, %s330
      %p332 = scmp.eq.s32.totalorder %s28, 0
      %p333 = por %p331, %p332
      %p334 = scmp.le.s32.totalorder 1, %s22
      %p335 = scmp.lt.s32.totalorder %s22, 3
      %p336 = pnand %p334, %p335
      %p337 = pneg %p336
      // Predicated region
      $region9: #{tpu_custom_call.1} parent=5 // pred_check
        _
      $region10: #{tpu_custom_call.1} parent=5 // pred_check_branch
        %339 = sbr.rel (%p336) target = $region12
      $region11: #{tpu_custom_call.1} parent=5 // pred_region
        %s340 = ssub.s32 %s22, 1
        // Predicated region
        $region13: #{tpu_custom_call.1} parent=11 // pred_check
          %p341 = pneg %p69
        $region14: #{tpu_custom_call.1} parent=11 // pred_check_branch
          %343 = sbr.rel (%p341) target = $region16
        $region15: #{tpu_custom_call.1} parent=11 // pred_region
          _
        $region16: #{tpu_custom_call.1} parent=11 // pred_fallthru
          _
        // Predicated region
        $region17: #{tpu_custom_call.1} parent=11 // pred_check
          %p344 = pneg %p90
        $region18: #{tpu_custom_call.1} parent=11 // pred_check_branch
          %346 = sbr.rel (%p344) target = $region20
        $region19: #{tpu_custom_call.1} parent=11 // pred_region
          _
        $region20: #{tpu_custom_call.1} parent=11 // pred_fallthru
          _
        // Predicated region
        $region21: #{tpu_custom_call.1} parent=11 // pred_check
          %p347 = pneg %p111
        $region22: #{tpu_custom_call.1} parent=11 // pred_check_branch
          %349 = sbr.rel (%p347) target = $region24
        $region23: #{tpu_custom_call.1} parent=11 // pred_region
          _
        $region24: #{tpu_custom_call.1} parent=11 // pred_fallthru
          _
        // Predicated region
        $region25: #{tpu_custom_call.1} parent=11 // pred_check
          %p350 = pneg %p132
        $region26: #{tpu_custom_call.1} parent=11 // pred_check_branch
          %352 = sbr.rel (%p350) target = $region28
        $region27: #{tpu_custom_call.1} parent=11 // pred_region
          _
        $region28: #{tpu_custom_call.1} parent=11 // pred_fallthru
          _
        // Predicated region
        $region29: #{tpu_custom_call.1} parent=11 // pred_check
          %p353 = pneg %p153
        $region30: #{tpu_custom_call.1} parent=11 // pred_check_branch
          %355 = sbr.rel (%p353) target = $region32
        $region31: #{tpu_custom_call.1} parent=11 // pred_region
          _
        $region32: #{tpu_custom_call.1} parent=11 // pred_fallthru
          _
        // Predicated region
        $region33: #{tpu_custom_call.1} parent=11 // pred_check
          %p356 = pneg %p174
        $region34: #{tpu_custom_call.1} parent=11 // pred_check_branch
          %358 = sbr.rel (%p356) target = $region36
        $region35: #{tpu_custom_call.1} parent=11 // pred_region
          _
        $region36: #{tpu_custom_call.1} parent=11 // pred_fallthru
          _
        // Predicated region
        $region37: #{tpu_custom_call.1} parent=11 // pred_check
          %p359 = pneg %p195
        $region38: #{tpu_custom_call.1} parent=11 // pred_check_branch
          %361 = sbr.rel (%p359) target = $region40
        $region39: #{tpu_custom_call.1} parent=11 // pred_region
          _
        $region40: #{tpu_custom_call.1} parent=11 // pred_fallthru
          _
        // Predicated region
        $region41: #{tpu_custom_call.1} parent=11 // pred_check
          %p362 = pneg %p216
        $region42: #{tpu_custom_call.1} parent=11 // pred_check_branch
          %364 = sbr.rel (%p362) target = $region44
        $region43: #{tpu_custom_call.1} parent=11 // pred_region
          _
        $region44: #{tpu_custom_call.1} parent=11 // pred_fallthru
          _
        // Predicated region
        $region45: #{tpu_custom_call.1} parent=11 // pred_check
          %p365 = pneg %p237
        $region46: #{tpu_custom_call.1} parent=11 // pred_check_branch
          %367 = sbr.rel (%p365) target = $region48
        $region47: #{tpu_custom_call.1} parent=11 // pred_region
          _
        $region48: #{tpu_custom_call.1} parent=11 // pred_fallthru
          _
        // Predicated region
        $region49: #{tpu_custom_call.1} parent=11 // pred_check
          %p368 = pneg %p258
        $region50: #{tpu_custom_call.1} parent=11 // pred_check_branch
          %370 = sbr.rel (%p368) target = $region52
        $region51: #{tpu_custom_call.1} parent=11 // pred_region
          _
        $region52: #{tpu_custom_call.1} parent=11 // pred_fallthru
          _
        // Predicated region
        $region53: #{tpu_custom_call.1} parent=11 // pred_check
          %p371 = pneg %p279
        $region54: #{tpu_custom_call.1} parent=11 // pred_check_branch
          %373 = sbr.rel (%p371) target = $region56
        $region55: #{tpu_custom_call.1} parent=11 // pred_region
          _
        $region56: #{tpu_custom_call.1} parent=11 // pred_fallthru
          _
        // Predicated region
        $region57: #{tpu_custom_call.1} parent=11 // pred_check
          %p374 = pneg %p300
        $region58: #{tpu_custom_call.1} parent=11 // pred_check_branch
          %376 = sbr.rel (%p374) target = $region60
        $region59: #{tpu_custom_call.1} parent=11 // pred_region
          _
        $region60: #{tpu_custom_call.1} parent=11 // pred_fallthru
          _
      $region12: #{tpu_custom_call.1} parent=5 // pred_fallthru
        _
      %p377 = scmp.lt.s32.totalorder %s22, 2
      // Predicated region
      $region61: #{tpu_custom_call.1} parent=5 // pred_check
        %p378 = pneg %p377
      $region62: #{tpu_custom_call.1} parent=5 // pred_check_branch
        %380 = sbr.rel (%p378) target = $region64
      $region63: #{tpu_custom_call.1} parent=5 // pred_region
        // Predicated region
        $region65: #{tpu_custom_call.1} parent=63 // pred_check
          %p381 = pneg %p42
        $region66: #{tpu_custom_call.1} parent=63 // pred_check_branch
          %383 = sbr.rel (%p381) target = $region68
        $region67: #{tpu_custom_call.1} parent=63 // pred_region
          %p384 = scmp.lt.s32.totalorder %s22, 1
          %s385 = scalar_select %p384, %s22, 1
          %s386 = smul.addr %s385, 2
          %s387 = smul.addr %s386, 4
          %s388 = scalar_lea.vmem %s0, %s387
        $region68: #{tpu_custom_call.1} parent=63 // pred_fallthru
          _
      $region64: #{tpu_custom_call.1} parent=5 // pred_fallthru
        _
      %p389 = scmp.le.s32.totalorder 1, %s22
      %p390 = scmp.lt.s32.totalorder %s22, 3
      %p391 = pnand %p389, %p390
      %p392 = pneg %p391
      // Predicated region
      $region69: #{tpu_custom_call.1} parent=5 // pred_check
        _
      $region70: #{tpu_custom_call.1} parent=5 // pred_check_branch
        %394 = sbr.rel (%p391) target = $region72
      $region71: #{tpu_custom_call.1} parent=5 // pred_region
        %s395 = ssub.s32 %s22, 1
        %p396 = scmp.lt.s32.totalorder %s27, 1
        %s397 = scalar_select %p396, %s27, 1
        %s398 = smul.addr %s397, 2
        %s399 = smul.addr %s398, 4
        %s400 = scalar_lea.vmem %s0, %s399
        %p401 = pneg %p48
        %p402 = pneg %p45
        %p403 = pneg %p69
        %p404 = pneg %p66
        %p405 = pneg %p90
        %p406 = pneg %p87
        %p407 = pneg %p111
        %p408 = pneg %p108
        %p409 = pneg %p132
        %p410 = pneg %p129
        %p411 = pneg %p153
        %p412 = pneg %p150
        %p413 = pneg %p174
        %p414 = pneg %p171
        %p415 = pneg %p195
        %p416 = pneg %p192
        %p417 = pneg %p216
        %p418 = pneg %p213
        %p419 = pneg %p237
        %p420 = pneg %p234
        %p421 = pneg %p258
        %p422 = pneg %p255
        %p423 = pneg %p279
        %p424 = pneg %p276
        %p425 = pneg %p300
        %p426 = pneg %p297
        %p427 = pneg %p326
        %p428 = pneg %p323
        %s429 = sand.u32 %s313, 1
        %s430 = scalar_lea.sflag [#allocation4], %s429
        %s431 = sand.u32 %s313, 1
        %s432 = smul.addr %s431, 8
        %s433 = scalar_lea.vmem [#allocation3], %s432
        %p434 = scmp.lt.s32.totalorder %s27, 1
        %s435 = scalar_select %p434, %s27, 1
        %s436 = smul.addr %s435, 2
        %s437 = smul.addr %s436, 4
        %s438 = scalar_lea.vmem %s0, %s437
        %v439 = vld [vmem:[%s438] sm:$0xff]
        %v441 = vcombine.high %v439, %v439
        %vm443 = vcmask 1043456
        %v444 = vsel %vm443, %v439, 0.0
        %v445 = vrot.slane %v444, 4
        %v446 = vadd.f32 %v444, %v445
        %v447 = vrot.slane %v446, 2
        %v448 = vadd.f32 %v446, %v447
        %v449 = vrot.slane %v448, 1
        %v450 = vadd.f32 %v448, %v449
        %v451 = vsel %vm443, %v441, 0.0
        %v452 = vrot.slane %v451, 4
        %v453 = vadd.f32 %v451, %v452
        %v454 = vrot.slane %v453, 2
        %v455 = vadd.f32 %v453, %v454
        %v456 = vrot.slane %v455, 1
        %v457 = vadd.f32 %v455, %v456
        %v458 = vmul.f32 %v450, 0.25
        %v459 = vmul.f32 %v457, 0.25
        %v462 = vcombine.low %v458, %v459
        %v464 = vsub.f32 %v439, %v462
        %v465 = vmul.f32 %v464, %v464
        %v467 = vcombine.high %v465, %v465
        %v469 = vsel %vm443, %v465, 0.0
        %v470 = vrot.slane %v469, 4
        %v471 = vadd.f32 %v469, %v470
        %v472 = vrot.slane %v471, 2
        %v473 = vadd.f32 %v471, %v472
        %v474 = vrot.slane %v473, 1
        %v475 = vadd.f32 %v473, %v474
        %v476 = vsel %vm443, %v467, 0.0
        %v477 = vrot.slane %v476, 4
        %v478 = vadd.f32 %v476, %v477
        %v479 = vrot.slane %v478, 2
        %v480 = vadd.f32 %v478, %v479
        %v481 = vrot.slane %v480, 1
        %v482 = vadd.f32 %v480, %v481
        %v483 = vmul.f32 %v475, 0.25
        %v484 = vmul.f32 %v482, 0.25
        %v485 = vadd.f32 %v483, 1e-06
        %v486 = vadd.f32 %v484, 1e-06
        %v487 = vrsqrt.pop %v485
        %v488 = vrsqrt.pop %v486
        %v491 = vcombine.low %v487, %v488
        %v493 = vmul.f32 %v464, %v491
        %v494 = vld [vmem:[%s2] sm:$0xf]
        %496 = vset.pattern.permute.xlu0 0
        %497 = vperm.xlu0 %496, %v494
        %v498 = vpop.permute.xlu0 %497
        %v500 = vunpack.c.l.s4 839922192
        %v501 = vunpack.c.0.s8 %v500
        %v502 = vlaneseq
        %v503 = vshrl.u32 %v502, 7
        %v504 = vsub.s32 %v501, %v503
        %v505 = vrot.slane %v498, %v504
        %v507 = vmul.f32 %v493, %v505
        %v508 = vld [vmem:[%s3] sm:$0xf]
        %510 = vset.pattern.permute.xlu0 0
        %511 = vperm.xlu0 %510, %v508
        %v512 = vpop.permute.xlu0 %511
        %v514 = vunpack.c.l.s4 839922192
        %v515 = vunpack.c.0.s8 %v514
        %v516 = vlaneseq
        %v517 = vshrl.u32 %v516, 7
        %v518 = vsub.s32 %v515, %v517
        %v519 = vrot.slane %v512, %v518
        %v521 = vadd.f32 %v507, %v519
        %v522 = vld [vmem:[%s4] sm:$0xff]
        %524 = vset.pattern.permute.xlu0 0
        %525 = vperm.xlu0 %524, %v522
        %v526 = vpop.permute.xlu0 %525
        %v529 = vlaneseq
        %v530 = vshrl.u32 %v529, 7
        %v531 = vsub.s32 0, %v530
        %v532 = vrot.slane %v521, %v531
        %v533 = vlaneseq
        %v534 = vshrl.u32 %v533, 7
        %v535 = vsub.s32 4, %v534
        %v536 = vrot.slane %v521, %v535
        %v539 = vlaneseq
        %v540 = vshrl.u32 %v539, 7
        %v541 = vsub.s32 0, %v540
        %v542 = vrot.slane %v532, %v541
        %v543 = vlaneseq
        %v544 = vshrl.u32 %v543, 7
        %v545 = vsub.s32 0, %v544
        %v546 = vrot.slane %v536, %v545
        %v547 = vmul.f32 %v526, %v542
        %v548 = vmul.f32 %v526, %v546
        %549 = vset.pattern.permute.xlu0 1
        %550 = vperm.xlu0 %549, %v522
        %v551 = vpop.permute.xlu0 %550
        %v553 = vlaneseq
        %v554 = vshrl.u32 %v553, 7
        %v555 = vsub.s32 1, %v554
        %v556 = vrot.slane %v521, %v555
        %v557 = vlaneseq
        %v558 = vshrl.u32 %v557, 7
        %v559 = vsub.s32 5, %v558
        %v560 = vrot.slane %v521, %v559
        %v563 = vlaneseq
        %v564 = vshrl.u32 %v563, 7
        %v565 = vsub.s32 1, %v564
        %v566 = vrot.slane %v556, %v565
        %v567 = vlaneseq
        %v568 = vshrl.u32 %v567, 7
        %v569 = vsub.s32 1, %v568
        %v570 = vrot.slane %v560, %v569
        %v571 = vmul.f32 %v551, %v566
        %v572 = vmul.f32 %v551, %v570
        %v573 = vadd.f32 %v547, %v571
        %v574 = vadd.f32 %v548, %v572
        %575 = vset.pattern.permute.xlu0 2
        %576 = vperm.xlu0 %575, %v522
        %v577 = vpop.permute.xlu0 %576
        %v579 = vlaneseq
        %v580 = vshrl.u32 %v579, 7
        %v581 = vsub.s32 2, %v580
        %v582 = vrot.slane %v521, %v581
        %v583 = vlaneseq
        %v584 = vshrl.u32 %v583, 7
        %v585 = vsub.s32 6, %v584
        %v586 = vrot.slane %v521, %v585
        %v589 = vlaneseq
        %v590 = vshrl.u32 %v589, 7
        %v591 = vsub.s32 2, %v590
        %v592 = vrot.slane %v582, %v591
        %v593 = vlaneseq
        %v594 = vshrl.u32 %v593, 7
        %v595 = vsub.s32 2, %v594
        %v596 = vrot.slane %v586, %v595
        %v597 = vmul.f32 %v577, %v592
        %v598 = vmul.f32 %v577, %v596
        %v599 = vadd.f32 %v573, %v597
        %v600 = vadd.f32 %v574, %v598
        %601 = vset.pattern.permute.xlu0 3
        %602 = vperm.xlu0 %601, %v522
        %v603 = vpop.permute.xlu0 %602
        %v605 = vlaneseq
        %v606 = vshrl.u32 %v605, 7
        %v607 = vsub.s32 3, %v606
        %v608 = vrot.slane %v521, %v607
        %v609 = vlaneseq
        %v610 = vshrl.u32 %v609, 7
        %v611 = vsub.s32 7, %v610
        %v612 = vrot.slane %v521, %v611
        %v615 = vlaneseq
        %v616 = vshrl.u32 %v615, 7
        %v617 = vsub.s32 3, %v616
        %v618 = vrot.slane %v608, %v617
        %v619 = vlaneseq
        %v620 = vshrl.u32 %v619, 7
        %v621 = vsub.s32 3, %v620
        %v622 = vrot.slane %v612, %v621
        %v623 = vmul.f32 %v603, %v618
        %v624 = vmul.f32 %v603, %v622
        %v625 = vadd.f32 %v599, %v623
        %v626 = vadd.f32 %v600, %v624
        %v627 = vld [vmem:[%s5] sm:$0xff]
        %629 = vset.pattern.permute.xlu0 0
        %630 = vperm.xlu0 %629, %v627
        %v631 = vpop.permute.xlu0 %630
        %v633 = vadd.f32 %v625, %v631
        %v634 = vadd.f32 %v626, %v631
        %635 = vst [vmem:[#allocation2] sm:$0xff] 0.0
        %636 = vst [vmem:[#allocation2 + $0x18] sm:$0xff] 0.0
        %637 = vst [vmem:[#allocation2 + $0x8] sm:$0xff] %v633
        %638 = vst [vmem:[#allocation2 + $0x10] sm:$0xff] %v634
        %v639 = vld [vmem:[%s1] sm:$0xf]
        %v640 = vld [vmem:[%s6] sm:$0xff]
        %v641 = vld [vmem:[#allocation2] sm:$0xff]
        %v642 = vld [vmem:[#allocation2 + $0x8] sm:$0xff]
        %v643 = vld [vmem:[#allocation2 + $0x10] sm:$0xff]
        %v645 = vlaneseq
        %v646 = vshrl.u32 %v645, 7
        %v647 = vsub.s32 0, %v646
        %v648 = vrot.slane %v639, %v647
        %v649 = vlaneseq
        %v650 = vshrl.u32 %v649, 7
        %v651 = vsub.s32 2, %v650
        %v652 = vrot.slane %v639, %v651
        %v655 = vlaneseq
        %v656 = vshrl.u32 %v655, 7
        %v657 = vsub.s32 0, %v656
        %v658 = vrot.slane %v648, %v657
        %v659 = vlaneseq
        %v660 = vshrl.u32 %v659, 7
        %v661 = vsub.s32 0, %v660
        %v662 = vrot.slane %v652, %v661
        %665 = vrot.lane.b32.xlu0 %v658, 111
        %v666 = vpop.permute.xlu0 %665
        %667 = vrot.lane.b32.xlu0 %v662, 111
        %v668 = vpop.permute.xlu0 %667
        %vm669 = vcmask 908288
        %v670 = vsel %vm669, %v666, %v668
        %v674 = vmul.f32 %v641, %v666
        %v675 = vmul.f32 %v642, %v670
        %v676 = vmul.f32 %v643, %v668
        %678 = vset.pattern.permute.xlu0 0
        %679 = vperm.xlu0 %678, %v640
        %v680 = vpop.permute.xlu0 %679
        %v682 = vmul.f32 %v674, %v680
        %v683 = vmul.f32 %v675, %v680
        %v684 = vmul.f32 %v676, %v680
        %685 = vset.pattern.permute.xlu0 1
        %686 = vperm.xlu0 %685, %v640
        %v687 = vpop.permute.xlu0 %686
        %v689 = vmul.f32 %v641, %v687
        %v690 = vmul.f32 %v642, %v687
        %v691 = vmul.f32 %v643, %v687
        %695 = vrot.lane.b32.xlu0 %v689, 127
        %v696 = vpop.permute.xlu0 %695
        %697 = vrot.lane.b32.xlu0 %v690, 127
        %v698 = vpop.permute.xlu0 %697
        %699 = vrot.lane.b32.xlu0 %v691, 127
        %v700 = vpop.permute.xlu0 %699
        %vm701 = vcmask 1039360
        %v702 = vsel %vm701, %v696, %v698
        %v703 = vsel %vm701, %v698, %v700
        %v707 = vadd.f32 %v682, %v702
        %v708 = vadd.f32 %v683, %v703
        %v709 = vadd.f32 %v684, %v700
        %v710 = vlaneseq
        %v711 = vshrl.u32 %v710, 7
        %v712 = vsub.s32 1, %v711
        %v713 = vrot.slane %v639, %v712
        %v714 = vlaneseq
        %v715 = vshrl.u32 %v714, 7
        %v716 = vsub.s32 3, %v715
        %v717 = vrot.slane %v639, %v716
        %v720 = vlaneseq
        %v721 = vshrl.u32 %v720, 7
        %v722 = vsub.s32 1, %v721
        %v723 = vrot.slane %v713, %v722
        %v724 = vlaneseq
        %v725 = vshrl.u32 %v724, 7
        %v726 = vsub.s32 1, %v725
        %v727 = vrot.slane %v717, %v726
        %730 = vrot.lane.b32.xlu0 %v723, 113
        %v731 = vpop.permute.xlu0 %730
        %732 = vrot.lane.b32.xlu0 %v727, 113
        %v733 = vpop.permute.xlu0 %732
        %vm734 = vcmask 924672
        %v735 = vsel %vm734, %v731, %v733
        %v739 = vmul.f32 %v641, %v731
        %v740 = vmul.f32 %v642, %v735
        %v741 = vmul.f32 %v643, %v733
        %742 = vset.pattern.permute.xlu0 2
        %743 = vperm.xlu0 %742, %v640
        %v744 = vpop.permute.xlu0 %743
        %v746 = vmul.f32 %v739, %v744
        %v747 = vmul.f32 %v740, %v744
        %v748 = vmul.f32 %v741, %v744
        %752 = vrot.lane.b32.xlu0 %v746, 126
        %v753 = vpop.permute.xlu0 %752
        %754 = vrot.lane.b32.xlu0 %v747, 126
        %v755 = vpop.permute.xlu0 %754
        %756 = vrot.lane.b32.xlu0 %v748, 126
        %v757 = vpop.permute.xlu0 %756
        %vm758 = vcmask 1031168
        %v759 = vsel %vm758, %v753, %v755
        %v760 = vsel %vm758, %v755, %v757
        %v764 = vadd.f32 %v707, %v759
        %v765 = vadd.f32 %v708, %v760
        %v766 = vadd.f32 %v709, %v757
        %767 = vrot.lane.b32.xlu0 %v658, 127
        %v768 = vpop.permute.xlu0 %767
        %769 = vrot.lane.b32.xlu0 %v662, 127
        %v770 = vpop.permute.xlu0 %769
        %v771 = vsel %vm701, %v768, %v770
        %v775 = vmul.f32 %v641, %v768
        %v776 = vmul.f32 %v642, %v771
        %v777 = vmul.f32 %v643, %v770
        %778 = vset.pattern.permute.xlu0 3
        %779 = vperm.xlu0 %778, %v640
        %v780 = vpop.permute.xlu0 %779
        %v782 = vmul.f32 %v775, %v780
        %v783 = vmul.f32 %v776, %v780
        %v784 = vmul.f32 %v777, %v780
        %788 = vrot.lane.b32.xlu0 %v782, 112
        %v789 = vpop.permute.xlu0 %788
        %790 = vrot.lane.b32.xlu0 %v783, 112
        %v791 = vpop.permute.xlu0 %790
        %792 = vrot.lane.b32.xlu0 %v784, 112
        %v793 = vpop.permute.xlu0 %792
        %vm794 = vcmask 916480
        %v795 = vsel %vm794, %v789, %v791
        %v796 = vsel %vm794, %v791, %v793
        %v800 = vadd.f32 %v764, %v795
        %v801 = vadd.f32 %v765, %v796
        %v802 = vadd.f32 %v766, %v793
        %803 = vset.pattern.permute.xlu0 4
        %804 = vperm.xlu0 %803, %v640
        %v805 = vpop.permute.xlu0 %804
        %v807 = vmul.f32 %v642, %v805
        %v808 = vmul.f32 %v643, %v805
        %811 = vrot.lane.b32.xlu0 %v807, 111
        %v812 = vpop.permute.xlu0 %811
        %813 = vrot.lane.b32.xlu0 %v808, 111
        %v814 = vpop.permute.xlu0 %813
        %v815 = vsel %vm669, %v812, %v814
        %v819 = vadd.f32 %v800, %v812
        %v820 = vadd.f32 %v801, %v815
        %v821 = vadd.f32 %v802, %v814
        %v822 = vld [vmem:[#allocation2 + $0x8] sm:$0xff]
        %v823 = vld [vmem:[#allocation2 + $0x10] sm:$0xff]
        %v824 = vld [vmem:[#allocation2 + $0x18] sm:$0xff]
        %825 = vrot.lane.b32.xlu0 %v723, 1
        %v826 = vpop.permute.xlu0 %825
        %827 = vrot.lane.b32.xlu0 %v727, 1
        %v828 = vpop.permute.xlu0 %827
        %vm829 = vcmask 7168
        %v830 = vsel %vm829, %v826, %v828
        %v834 = vmul.f32 %v822, %v826
        %v835 = vmul.f32 %v823, %v830
        %v836 = vmul.f32 %v824, %v828
        %837 = vset.pattern.permute.xlu0 5
        %838 = vperm.xlu0 %837, %v640
        %v839 = vpop.permute.xlu0 %838
        %v841 = vmul.f32 %v834, %v839
        %v842 = vmul.f32 %v835, %v839
        %v843 = vmul.f32 %v836, %v839
        %847 = vrot.lane.b32.xlu0 %v841, 110
        %v848 = vpop.permute.xlu0 %847
        %849 = vrot.lane.b32.xlu0 %v842, 110
        %v850 = vpop.permute.xlu0 %849
        %851 = vrot.lane.b32.xlu0 %v843, 110
        %v852 = vpop.permute.xlu0 %851
        %vm853 = vcmask 900096
        %v854 = vsel %vm853, %v848, %v850
        %v855 = vsel %vm853, %v850, %v852
        %v859 = vadd.f32 %v819, %v848
        %v860 = vadd.f32 %v820, %v854
        %v861 = vadd.f32 %v821, %v855
        %862 = vrot.lane.b32.xlu0 %v658, 15
        %v863 = vpop.permute.xlu0 %862
        %864 = vrot.lane.b32.xlu0 %v662, 15
        %v865 = vpop.permute.xlu0 %864
        %vm866 = vcmask 121856
        %v867 = vsel %vm866, %v863, %v865
        %v871 = vmul.f32 %v822, %v863
        %v872 = vmul.f32 %v823, %v867
        %v873 = vmul.f32 %v824, %v865
        %874 = vset.pattern.permute.xlu0 6
        %875 = vperm.xlu0 %874, %v640
        %v876 = vpop.permute.xlu0 %875
        %v878 = vmul.f32 %v871, %v876
        %v879 = vmul.f32 %v872, %v876
        %v880 = vmul.f32 %v873, %v876
        %884 = vrot.lane.b32.xlu0 %v878, 96
        %v885 = vpop.permute.xlu0 %884
        %886 = vrot.lane.b32.xlu0 %v879, 96
        %v887 = vpop.permute.xlu0 %886
        %888 = vrot.lane.b32.xlu0 %v880, 96
        %v889 = vpop.permute.xlu0 %888
        %vm890 = vcmask 785408
        %v891 = vsel %vm890, %v885, %v887
        %v892 = vsel %vm890, %v887, %v889
        %v896 = vadd.f32 %v859, %v885
        %v897 = vadd.f32 %v860, %v891
        %v898 = vadd.f32 %v861, %v892
        %899 = vset.pattern.permute.xlu0 7
        %900 = vperm.xlu0 %899, %v640
        %v901 = vpop.permute.xlu0 %900
        %v903 = vmul.f32 %v822, %v901
        %v904 = vmul.f32 %v823, %v901
        %v905 = vmul.f32 %v824, %v901
        %909 = vrot.lane.b32.xlu0 %v903, 95
        %v910 = vpop.permute.xlu0 %909
        %911 = vrot.lane.b32.xlu0 %v904, 95
        %v912 = vpop.permute.xlu0 %911
        %913 = vrot.lane.b32.xlu0 %v905, 95
        %v914 = vpop.permute.xlu0 %913
        %vm915 = vcmask 777216
        %v916 = vsel %vm915, %v910, %v912
        %v917 = vsel %vm915, %v912, %v914
        %v921 = vadd.f32 %v896, %v910
        %v922 = vadd.f32 %v897, %v916
        %v923 = vadd.f32 %v898, %v917
        %924 = vrot.lane.b32.xlu0 %v723, 17
        %v925 = vpop.permute.xlu0 %924
        %926 = vrot.lane.b32.xlu0 %v727, 17
        %v927 = vpop.permute.xlu0 %926
        %vm928 = vcmask 138240
        %v929 = vsel %vm928, %v925, %v927
        %v933 = vmul.f32 %v822, %v925
        %v934 = vmul.f32 %v823, %v929
        %v935 = vmul.f32 %v824, %v927
        %936 = vset.pattern.permute.xlu0 8
        %937 = vperm.xlu0 %936, %v640
        %v938 = vpop.permute.xlu0 %937
        %v940 = vmul.f32 %v933, %v938
        %v941 = vmul.f32 %v934, %v938
        %v942 = vmul.f32 %v935, %v938
        %946 = vrot.lane.b32.xlu0 %v940, 94
        %v947 = vpop.permute.xlu0 %946
        %948 = vrot.lane.b32.xlu0 %v941, 94
        %v949 = vpop.permute.xlu0 %948
        %950 = vrot.lane.b32.xlu0 %v942, 94
        %v951 = vpop.permute.xlu0 %950
        %vm952 = vcmask 769024
        %v953 = vsel %vm952, %v947, %v949
        %v954 = vsel %vm952, %v949, %v951
        %v958 = vadd.f32 %v921, %v947
        %v959 = vadd.f32 %v922, %v953
        %v960 = vadd.f32 %v923, %v954
        %v961 = vld [vmem:[%s7] sm:$0xff]
        %963 = vset.pattern.permute.xlu0 0
        %964 = vperm.xlu0 %963, %v961
        %v965 = vpop.permute.xlu0 %964
        %v967 = vadd.f32 %v958, %v965
        %v968 = vadd.f32 %v959, %v965
        %v969 = vadd.f32 %v960, %v965
        %v973 = vrot.slane %v967, 4
        %v974 = vrot.slane %v968, 4
        %v975 = vrot.slane %v969, 4
        %v979 = vmul.f32 %v967, %v973
        %v980 = vmul.f32 %v968, %v974
        %v981 = vmul.f32 %v969, %v975
        %v982 = vld [vmem:[%s8] sm:$0xf]
        %984 = vset.pattern.permute.xlu0 0
        %985 = vperm.xlu0 %984, %v982
        %v986 = vpop.permute.xlu0 %985
        %v988 = vlaneseq
        %v989 = vshrl.u32 %v988, 7
        %v990 = vsub.s32 0, %v989
        %v991 = vrot.slane %v979, %v990
        %v992 = vlaneseq
        %v993 = vshrl.u32 %v992, 7
        %v994 = vsub.s32 0, %v993
        %v995 = vrot.slane %v980, %v994
        %v996 = vlaneseq
        %v997 = vshrl.u32 %v996, 7
        %v998 = vsub.s32 0, %v997
        %v999 = vrot.slane %v981, %v998
        %v1000 = vmul.f32 %v986, %v991
        %v1001 = vmul.f32 %v986, %v995
        %v1002 = vmul.f32 %v986, %v999
        %1003 = vset.pattern.permute.xlu0 1
        %1004 = vperm.xlu0 %1003, %v982
        %v1005 = vpop.permute.xlu0 %1004
        %v1007 = vlaneseq
        %v1008 = vshrl.u32 %v1007, 7
        %v1009 = vsub.s32 1, %v1008
        %v1010 = vrot.slane %v979, %v1009
        %v1011 = vlaneseq
        %v1012 = vshrl.u32 %v1011, 7
        %v1013 = vsub.s32 1, %v1012
        %v1014 = vrot.slane %v980, %v1013
        %v1015 = vlaneseq
        %v1016 = vshrl.u32 %v1015, 7
        %v1017 = vsub.s32 1, %v1016
        %v1018 = vrot.slane %v981, %v1017
        %v1019 = vmul.f32 %v1005, %v1010
        %v1020 = vmul.f32 %v1005, %v1014
        %v1021 = vmul.f32 %v1005, %v1018
        %v1022 = vadd.f32 %v1000, %v1019
        %v1023 = vadd.f32 %v1001, %v1020
        %v1024 = vadd.f32 %v1002, %v1021
        %1025 = vset.pattern.permute.xlu0 2
        %1026 = vperm.xlu0 %1025, %v982
        %v1027 = vpop.permute.xlu0 %1026
        %v1029 = vlaneseq
        %v1030 = vshrl.u32 %v1029, 7
        %v1031 = vsub.s32 2, %v1030
        %v1032 = vrot.slane %v979, %v1031
        %v1033 = vlaneseq
        %v1034 = vshrl.u32 %v1033, 7
        %v1035 = vsub.s32 2, %v1034
        %v1036 = vrot.slane %v980, %v1035
        %v1037 = vlaneseq
        %v1038 = vshrl.u32 %v1037, 7
        %v1039 = vsub.s32 2, %v1038
        %v1040 = vrot.slane %v981, %v1039
        %v1041 = vmul.f32 %v1027, %v1032
        %v1042 = vmul.f32 %v1027, %v1036
        %v1043 = vmul.f32 %v1027, %v1040
        %v1044 = vadd.f32 %v1022, %v1041
        %v1045 = vadd.f32 %v1023, %v1042
        %v1046 = vadd.f32 %v1024, %v1043
        %1047 = vset.pattern.permute.xlu0 3
        %1048 = vperm.xlu0 %1047, %v982
        %v1049 = vpop.permute.xlu0 %1048
        %v1051 = vlaneseq
        %v1052 = vshrl.u32 %v1051, 7
        %v1053 = vsub.s32 3, %v1052
        %v1054 = vrot.slane %v979, %v1053
        %v1055 = vlaneseq
        %v1056 = vshrl.u32 %v1055, 7
        %v1057 = vsub.s32 3, %v1056
        %v1058 = vrot.slane %v980, %v1057
        %v1059 = vlaneseq
        %v1060 = vshrl.u32 %v1059, 7
        %v1061 = vsub.s32 3, %v1060
        %v1062 = vrot.slane %v981, %v1061
        %v1063 = vmul.f32 %v1049, %v1054
        %v1064 = vmul.f32 %v1049, %v1058
        %v1065 = vmul.f32 %v1049, %v1062
        %v1066 = vadd.f32 %v1044, %v1063
        %v1067 = vadd.f32 %v1045, %v1064
        %v1068 = vadd.f32 %v1046, %v1065
        %1072 = vrot.lane.b32.xlu0 %v1066, 17
        %v1073 = vpop.permute.xlu0 %1072
        %1074 = vrot.lane.b32.xlu0 %v1067, 17
        %v1075 = vpop.permute.xlu0 %1074
        %1076 = vrot.lane.b32.xlu0 %v1068, 17
        %v1077 = vpop.permute.xlu0 %1076
        %v1078 = vsel %vm928, %v1073, %v1075
        %v1079 = vsel %vm928, %v1075, %v1077
        %v1082 = vsel %vm443, %v1078, 0.0
        %v1083 = vsel %vm443, %v1079, 0.0
        %v1084 = vadd.f32 %v1082, %v1083
        %1085 = vadd.xlane.f32.xlu0 %v1084
        %v1086 = vpop.xlane.xlu0 %1085
        %v1087 = vmul.f32 %v1086, 0.00390625
        %v1088 = vld [vmem:[%s9] sm:$0xf]
        %v1089 = vadd.f32 %v1087, %v1088
        %1091 = vset.pattern.permute.xlu0 0
        %1092 = vperm.xlu0 %1091, %v1089
        %v1093 = vpop.permute.xlu0 %1092
        %v1095 = vmul.f32 %v979, %v1093
        %v1096 = vmul.f32 %v980, %v1093
        %v1097 = vmul.f32 %v981, %v1093
        %v1098 = vld [vmem:[%s10] sm:$0xf]
        %1100 = vset.pattern.permute.xlu0 0
        %1101 = vperm.xlu0 %1100, %v1098
        %v1102 = vpop.permute.xlu0 %1101
        %v1104 = vlaneseq
        %v1105 = vshrl.u32 %v1104, 7
        %v1106 = vsub.s32 0, %v1105
        %v1107 = vrot.slane %v1095, %v1106
        %v1108 = vlaneseq
        %v1109 = vshrl.u32 %v1108, 7
        %v1110 = vsub.s32 0, %v1109
        %v1111 = vrot.slane %v1096, %v1110
        %v1112 = vlaneseq
        %v1113 = vshrl.u32 %v1112, 7
        %v1114 = vsub.s32 0, %v1113
        %v1115 = vrot.slane %v1097, %v1114
        %v1116 = vmul.f32 %v1102, %v1107
        %v1117 = vmul.f32 %v1102, %v1111
        %v1118 = vmul.f32 %v1102, %v1115
        %1119 = vset.pattern.permute.xlu0 1
        %1120 = vperm.xlu0 %1119, %v1098
        %v1121 = vpop.permute.xlu0 %1120
        %v1123 = vlaneseq
        %v1124 = vshrl.u32 %v1123, 7
        %v1125 = vsub.s32 1, %v1124
        %v1126 = vrot.slane %v1095, %v1125
        %v1127 = vlaneseq
        %v1128 = vshrl.u32 %v1127, 7
        %v1129 = vsub.s32 1, %v1128
        %v1130 = vrot.slane %v1096, %v1129
        %v1131 = vlaneseq
        %v1132 = vshrl.u32 %v1131, 7
        %v1133 = vsub.s32 1, %v1132
        %v1134 = vrot.slane %v1097, %v1133
        %v1135 = vmul.f32 %v1121, %v1126
        %v1136 = vmul.f32 %v1121, %v1130
        %v1137 = vmul.f32 %v1121, %v1134
        %v1138 = vadd.f32 %v1116, %v1135
        %v1139 = vadd.f32 %v1117, %v1136
        %v1140 = vadd.f32 %v1118, %v1137
        %1141 = vset.pattern.permute.xlu0 2
        %1142 = vperm.xlu0 %1141, %v1098
        %v1143 = vpop.permute.xlu0 %1142
        %v1145 = vlaneseq
        %v1146 = vshrl.u32 %v1145, 7
        %v1147 = vsub.s32 2, %v1146
        %v1148 = vrot.slane %v1095, %v1147
        %v1149 = vlaneseq
        %v1150 = vshrl.u32 %v1149, 7
        %v1151 = vsub.s32 2, %v1150
        %v1152 = vrot.slane %v1096, %v1151
        %v1153 = vlaneseq
        %v1154 = vshrl.u32 %v1153, 7
        %v1155 = vsub.s32 2, %v1154
        %v1156 = vrot.slane %v1097, %v1155
        %v1157 = vmul.f32 %v1143, %v1148
        %v1158 = vmul.f32 %v1143, %v1152
        %v1159 = vmul.f32 %v1143, %v1156
        %v1160 = vadd.f32 %v1138, %v1157
        %v1161 = vadd.f32 %v1139, %v1158
        %v1162 = vadd.f32 %v1140, %v1159
        %1163 = vset.pattern.permute.xlu0 3
        %1164 = vperm.xlu0 %1163, %v1098
        %v1165 = vpop.permute.xlu0 %1164
        %v1167 = vlaneseq
        %v1168 = vshrl.u32 %v1167, 7
        %v1169 = vsub.s32 3, %v1168
        %v1170 = vrot.slane %v1095, %v1169
        %v1171 = vlaneseq
        %v1172 = vshrl.u32 %v1171, 7
        %v1173 = vsub.s32 3, %v1172
        %v1174 = vrot.slane %v1096, %v1173
        %v1175 = vlaneseq
        %v1176 = vshrl.u32 %v1175, 7
        %v1177 = vsub.s32 3, %v1176
        %v1178 = vrot.slane %v1097, %v1177
        %v1179 = vmul.f32 %v1165, %v1170
        %v1180 = vmul.f32 %v1165, %v1174
        %v1181 = vmul.f32 %v1165, %v1178
        %v1182 = vadd.f32 %v1160, %v1179
        %v1183 = vadd.f32 %v1161, %v1180
        %v1184 = vadd.f32 %v1162, %v1181
        %v1185 = vld [vmem:[%s11] sm:$0xf]
        %1187 = vset.pattern.permute.xlu0 0
        %1188 = vperm.xlu0 %1187, %v1185
        %v1189 = vpop.permute.xlu0 %1188
        %v1191 = vadd.f32 %v1182, %v1189
        %v1192 = vadd.f32 %v1183, %v1189
        %v1193 = vadd.f32 %v1184, %v1189
        %v1194 = vld [vmem:[%s12] sm:$0xf]
        %1196 = vset.pattern.permute.xlu0 0
        %1197 = vperm.xlu0 %1196, %v1194
        %v1198 = vpop.permute.xlu0 %1197
        %v1200 = vmul.f32 %v1191, %v1198
        %v1201 = vmul.f32 %v1192, %v1198
        %v1202 = vmul.f32 %v1193, %v1198
        %v1206 = vcombine.low %v1200, %v1201
        %1207 = vrot.lane.b32.xlu0 %v1206, 17
        %v1208 = vpop.permute.xlu0 %1207
        %1209 = vrot.lane.b32.xlu0 %v1202, 17
        %v1210 = vpop.permute.xlu0 %1209
        %v1211 = vrot.slane %v1208, 4
        %v1212 = vrot.slane %v1210, 4
        %v1213 = vsel %vm443, %v1211, %v1212
        %v1214 = vsel %vm928, %v1208, %v1213
        %v1216 = vadd.f32 %v439, %v1214
        %1217 = vst [vmem:[%s433] sm:$0xff] %v1216
        %s1218 = sand.u32 %s313, 1
        %s1219 = scalar_lea.sflag [#allocation4], %s1218
        %s1220 = sand.u32 %s313, 1
        %s1221 = smul.addr %s1220, 8
        %s1222 = scalar_lea.vmem [#allocation3], %s1221
        // Predicated region
        $region73: #{tpu_custom_call.1} parent=71 // pred_check
          %p1223 = pneg %p323
        $region74: #{tpu_custom_call.1} parent=71 // pred_check_branch
          %1225 = sbr.rel (%p1223) target = $region76
        $region75: #{tpu_custom_call.1} parent=71 // pred_region
          %s1227 = ssub.s32 128, 128
          %1228 = vsyncadd %s1219, %s1227
          %s1229 = smul.addr %s27, 2
          %s1230 = smul.addr %s1229, 64
          %s1231 = scalar_lea.hbm %s13, %s1230
          %s1233 = sshll.u32 %s1222, 4
          %s1234 = int_to_ptr.vmem [resolvable:$true] %s1233
          %1236 = dma.vmem_to_hbm [thread:$0]  %s1234, 128, %s1231, %s1219
        $region76: #{tpu_custom_call.1} parent=71 // pred_fallthru
          _
      $region72: #{tpu_custom_call.1} parent=5 // pred_fallthru
        _
      %p1237 = scmp.le.s32.totalorder 2, %s22
      // Predicated region
      $region77: #{tpu_custom_call.1} parent=5 // pred_check
        %p1238 = pneg %p1237
      $region78: #{tpu_custom_call.1} parent=5 // pred_check_branch
        %1240 = sbr.rel (%p1238) target = $region80
      $region79: #{tpu_custom_call.1} parent=5 // pred_region
        %s1241 = ssub.s32 %s22, 2
        // Predicated region
        $region81: #{tpu_custom_call.1} parent=79 // pred_check
          %p1242 = pneg %p329
        $region82: #{tpu_custom_call.1} parent=79 // pred_check_branch
          %1244 = sbr.rel (%p1242) target = $region84
        $region83: #{tpu_custom_call.1} parent=79 // pred_region
          %s1245 = sand.u32 %s314, 1
          %s1246 = scalar_lea.sflag [#allocation4], %s1245
          %s1247 = sand.u32 %s314, 1
          %s1248 = smul.addr %s1247, 8
          %s1249 = scalar_lea.vmem [#allocation3], %s1248
          %1250 = dma.done %s1246, 128
        $region84: #{tpu_custom_call.1} parent=79 // pred_fallthru
          _
      $region80: #{tpu_custom_call.1} parent=5 // pred_fallthru
        _
    $region6: #{tpu_custom_call.1} parent=1 // loop_footer
      %s26 = sadd.s32 1, %s22
    $region7: #{tpu_custom_call.1} parent=1 // loop_footer_branch
      %21 = sbr.rel target = $region3
    $region8: #{tpu_custom_call.1} parent=1 // loop_exit
      _
    %1251 = vsyncpa [#allocation4], 1
    %s1252 = scalar_lea.sflag [#allocation4], 1
    %1253 = vsyncpa %s1252, 1

</llo_original>
